<compile_context>
chip_gen: v5e
topology: v5e:2x2
jax: 0.10.0
libtpu: 0.0.40
codegen_flags: <defaults>
</compile_context>

<pallas_src>
import functools

import jax
import jax.numpy as jnp
from jax.experimental import pallas as pl
from jax.experimental.pallas import tpu as pltpu

IN_FEATURES = 1 * 28 * 28          # 784 (kept as-is; no K padding)
HIDDEN = 512
OUT_FEATURES = 10
OUT_PAD = 128                      # lane-dense output width


def _round_up(x, m):
    return ((x + m - 1) // m) * m


def _cdiv(a, b):
    return (a + b - 1) // b


def _choose_tiling(B, block_b):
    """Pick (tb, num_tiles, b_pad) to amortize per-step overhead without pad waste."""
    # At least 2 tiles once the batch is big enough so both v7x TensorCores get work.
    min_tiles = 2 if B >= 64 else 1
    num_tiles = max(min_tiles, _cdiv(B, block_b))
    tb = _round_up(_cdiv(B, num_tiles), 16)     # multiple of 16: bf16 sublane packing
    b_pad = tb * num_tiles
    return tb, num_tiles, b_pad


def _mlp_kernel(x_ref, w1_ref, b1_ref, w2_ref, b2_ref, o_ref):
    # x_ref:  (TB, 784) f32     w1_ref: (784, 512) bf16   b1_ref: (1, 512) f32
    # w2_ref: (512, 128) bf16   b2_ref: (1, 128)  f32     o_ref:  (TB, 128) bf16
    x = x_ref[...].astype(w1_ref.dtype)                       # f32 -> bf16 on the VPU
    h = jnp.dot(x, w1_ref[...], preferred_element_type=jnp.float32)
    h = jnp.maximum(h + b1_ref[...], 0.0)                     # ReLU in f32
    out = jnp.dot(h.astype(w2_ref.dtype), w2_ref[...],
                  preferred_element_type=jnp.float32)
    o_ref[...] = (out + b2_ref[...]).astype(o_ref.dtype)


def prepare_params(w1, b1, w2, b2, compute_dtype=jnp.bfloat16):
    """One-off layout plumbing: cast weights to bf16, pad the 10-wide output dim to 128.

    Call this ONCE and pass the results to dnn_random_fit_forward (keeps the per-call
    path free of XLA pad/convert passes).
    """
    w1_p = w1.astype(jnp.float32).astype(compute_dtype)                    # (784, 512) bf16
    w2_p = jnp.pad(w2.astype(jnp.float32),
                   ((0, 0), (0, OUT_PAD - OUT_FEATURES))).astype(compute_dtype)  # (512, 128)
    b1_p = b1.reshape(1, HIDDEN).astype(jnp.float32)                       # (1, 512) f32
    b2_p = jnp.pad(b2.reshape(1, OUT_FEATURES).astype(jnp.float32),
                   ((0, 0), (0, OUT_PAD - OUT_FEATURES)))                  # (1, 128) f32
    return w1_p, b1_p, w2_p, b2_p


@functools.partial(jax.jit, static_argnames=("block_b",))
def dnn_random_fit_forward(x_nchw, w1_p, b1_p, w2_p, b2_p, *, block_b=1024):
    """x_nchw: (B, 1, 28, 28) float32 -> logits (B, 10) float32.

    w1_p/b1_p/w2_p/b2_p must come from prepare_params().
    """
    B = x_nchw.shape[0]
    x = x_nchw.reshape(B, -1).astype(jnp.float32)
    assert x.shape[1] == IN_FEATURES

    tb, num_tiles, b_pad = _choose_tiling(B, block_b)
    x_p = x if b_pad == B else jnp.pad(x, ((0, b_pad - B), (0, 0)))        # f32, no K pad

    cost = pl.CostEstimate(
        flops=2 * b_pad * (IN_FEATURES * HIDDEN + HIDDEN * OUT_PAD),
        transcendentals=0,
        bytes_accessed=(x_p.size * 4                                        # x read (f32)
                        + w1_p.size * 2 + w2_p.size * 2                     # bf16 weights
                        + b1_p.size * 4 + b2_p.size * 4
                        + b_pad * OUT_PAD * 2),                             # bf16 out write
    )

    out_padded = pl.pallas_call(
        _mlp_kernel,
        out_shape=jax.ShapeDtypeStruct((b_pad, OUT_PAD), jnp.bfloat16),
        grid=(num_tiles,),
        in_specs=[
            pl.BlockSpec((tb, IN_FEATURES), lambda i: (i, 0)),       # x: streamed f32 tiles
            pl.BlockSpec((IN_FEATURES, HIDDEN), lambda i: (0, 0)),   # W1 bf16: VMEM-resident
            pl.BlockSpec((1, HIDDEN), lambda i: (0, 0)),             # b1 f32: resident
            pl.BlockSpec((HIDDEN, OUT_PAD), lambda i: (0, 0)),       # W2 bf16 (padded cols)
            pl.BlockSpec((1, OUT_PAD), lambda i: (0, 0)),            # b2 f32 (padded)
        ],
        out_specs=pl.BlockSpec((tb, OUT_PAD), lambda i: (i, 0)),     # lane-dense bf16 output
        compiler_params=pltpu.CompilerParams(
            dimension_semantics=("parallel",)),                      # megacore sharding on v7x
        cost_estimate=cost,
    )(x_p, w1_p, b1_p, w2_p, b2_p)

    return out_padded[:B, :OUT_FEATURES].astype(jnp.float32)


def init_params(key):
    """Deterministic init matching torch.nn.Linear default: U(-1/sqrt(fan_in), 1/sqrt(fan_in))."""
    k1, k2, k3, k4 = jax.random.split(key, 4)
    bound1 = 1.0 / jnp.sqrt(jnp.float32(IN_FEATURES))
    bound2 = 1.0 / jnp.sqrt(jnp.float32(HIDDEN))
    w1 = jax.random.uniform(k1, (IN_FEATURES, HIDDEN), jnp.float32, -bound1, bound1)
    b1 = jax.random.uniform(k2, (1, HIDDEN), jnp.float32, -bound1, bound1)
    w2 = jax.random.uniform(k3, (HIDDEN, OUT_FEATURES), jnp.float32, -bound2, bound2)
    b2 = jax.random.uniform(k4, (1, OUT_FEATURES), jnp.float32, -bound2, bound2)
    return w1, b1, w2, b2


if __name__ == "__main__":
    key = jax.random.PRNGKey(0)
    kx, kp = jax.random.split(key)

    B = 2
    x = jax.random.normal(kx, (B, 1, 28, 28), jnp.float32)   # NCHW, like PyTorch
    w1, b1, w2, b2 = init_params(kp)

    # One-off weight layout/cast (outside the per-call path).
    params = prepare_params(w1, b1, w2, b2)

    logits = dnn_random_fit_forward(x, *params)
    jax.block_until_ready(logits)
    assert logits.shape == (B, OUT_FEATURES)

    # Reference in plain JAX with the same bf16 cast of x/W1/W2/h (f32 accumulation),
    # matching the kernel's numerics up to accumulation order + bf16 output rounding.
    x_flat = x.reshape(B, -1)
    xb = x_flat.astype(jnp.bfloat16).astype(jnp.float32)
    w1b = w1.astype(jnp.bfloat16).astype(jnp.float32)
    w2b = w2.astype(jnp.bfloat16).astype(jnp.float32)
    h = jnp.maximum(xb @ w1b + b1, 0.0)
    ref = h.astype(jnp.bfloat16).astype(jnp.float32) @ w2b + b2
    assert jnp.allclose(logits, ref, atol=1e-2, rtol=1e-2), (
        float(jnp.max(jnp.abs(logits - ref))))

    # Sanity vs full-f32 math (loose tolerance: bf16 weight/activation/output quantization).
    ref_f32 = jnp.maximum(x_flat @ w1 + b1, 0.0) @ w2 + b2
    assert jnp.allclose(logits, ref_f32, atol=5e-2, rtol=5e-2)

    print("KERNEL_OK")
</pallas_src>

<mosaic_0001>
module attributes {stable_mosaic.version = 11 : i64} {
  func.func @_mlp_kernel(%arg0: i32, %arg1: memref<16x784xf32, #tpu.memory_space<vmem>>, %arg2: memref<784x512xbf16, #tpu.memory_space<vmem>>, %arg3: memref<1x512xf32, #tpu.memory_space<vmem>>, %arg4: memref<512x128xbf16, #tpu.memory_space<vmem>>, %arg5: memref<1x128xf32, #tpu.memory_space<vmem>>, %arg6: memref<16x128xbf16, #tpu.memory_space<vmem>>) attributes {dimension_semantics = [#tpu.dimension_semantics<parallel>], iteration_bounds = array<i64: 1>, scalar_prefetch = 0 : i64, scratch_operands = 0 : i64, tpu.core_type = #tpu.core_type<tc>, window_params = [{transform_indices = @transform_0, window_bounds = array<i64: 16, 784>}, {pipeline_mode = #tpu.pipeline_mode<synchronous>, transform_indices = @transform_1, window_bounds = array<i64: 784, 512>}, {pipeline_mode = #tpu.pipeline_mode<synchronous>, transform_indices = @transform_2, window_bounds = array<i64: 1, 512>}, {pipeline_mode = #tpu.pipeline_mode<synchronous>, transform_indices = @transform_3, window_bounds = array<i64: 512, 128>}, {pipeline_mode = #tpu.pipeline_mode<synchronous>, transform_indices = @transform_4, window_bounds = array<i64: 1, 128>}, {transform_indices = @transform_5, window_bounds = array<i64: 16, 128>}]} {
    %c0 = arith.constant 0 : index
    %c0_0 = arith.constant 0 : index
    %0 = vector.load %arg1[%c0, %c0_0] : memref<16x784xf32, #tpu.memory_space<vmem>>, vector<16x784xf32>
    %1 = arith.truncf %0 : vector<16x784xf32> to vector<16x784xbf16>
    %c0_1 = arith.constant 0 : index
    %c0_2 = arith.constant 0 : index
    %2 = vector.load %arg2[%c0_1, %c0_2] : memref<784x512xbf16, #tpu.memory_space<vmem>>, vector<784x512xbf16>
    %cst = arith.constant dense<0.000000e+00> : vector<16x512xf32>
    %3 = tpu.matmul %1, %2, %cst {dimension_numbers = #tpu.dot_dimension_numbers<[1], [0], [0], [1], [0, 0, 1, 1], [], []>} : vector<16x784xbf16>, vector<784x512xbf16>, vector<16x512xf32> -> vector<16x512xf32>
    %c0_3 = arith.constant 0 : index
    %c0_4 = arith.constant 0 : index
    %4 = vector.load %arg3[%c0_3, %c0_4] : memref<1x512xf32, #tpu.memory_space<vmem>>, vector<1x512xf32>
    %5 = vector.broadcast %4 : vector<1x512xf32> to vector<16x512xf32>
    %6 = arith.addf %3, %5 : vector<16x512xf32>
    %cst_5 = arith.constant 0.000000e+00 : f32
    %7 = vector.broadcast %cst_5 : f32 to vector<16x512xf32>
    %8 = arith.maximumf %6, %7 : vector<16x512xf32>
    %9 = arith.truncf %8 : vector<16x512xf32> to vector<16x512xbf16>
    %c0_6 = arith.constant 0 : index
    %c0_7 = arith.constant 0 : index
    %10 = vector.load %arg4[%c0_6, %c0_7] : memref<512x128xbf16, #tpu.memory_space<vmem>>, vector<512x128xbf16>
    %cst_8 = arith.constant dense<0.000000e+00> : vector<16x128xf32>
    %11 = tpu.matmul %9, %10, %cst_8 {dimension_numbers = #tpu.dot_dimension_numbers<[1], [0], [0], [1], [0, 0, 1, 1], [], []>} : vector<16x512xbf16>, vector<512x128xbf16>, vector<16x128xf32> -> vector<16x128xf32>
    %c0_9 = arith.constant 0 : index
    %c0_10 = arith.constant 0 : index
    %12 = vector.load %arg5[%c0_9, %c0_10] : memref<1x128xf32, #tpu.memory_space<vmem>>, vector<1x128xf32>
    %13 = vector.broadcast %12 : vector<1x128xf32> to vector<16x128xf32>
    %14 = arith.addf %11, %13 : vector<16x128xf32>
    %15 = arith.truncf %14 : vector<16x128xf32> to vector<16x128xbf16>
    %c0_11 = arith.constant 0 : index
    %c0_12 = arith.constant 0 : index
    %16 = vector.load %arg6[%c0_11, %c0_12] : memref<16x128xbf16, #tpu.memory_space<vmem>>, vector<16x128xbf16>
    tpu.vector_store %arg6[%c0_11, %c0_12], %15 {strides = array<i32>} : memref<16x128xbf16, #tpu.memory_space<vmem>>, vector<16x128xbf16>,
    return
  }
  func.func @transform_0(%arg0: i32) -> (i32, i32) {
    %c0_i32 = arith.constant 0 : i32
    %c0_i32_0 = arith.constant 0 : i32
    return %arg0, %c0_i32 : i32, i32
  }
  func.func @transform_1(%arg0: i32) -> (i32, i32) {
    %c0_i32 = arith.constant 0 : i32
    %c0_i32_0 = arith.constant 0 : i32
    %c0_i32_1 = arith.constant 0 : i32
    return %c0_i32, %c0_i32_0 : i32, i32
  }
  func.func @transform_2(%arg0: i32) -> (i32, i32) {
    %c0_i32 = arith.constant 0 : i32
    %c0_i32_0 = arith.constant 0 : i32
    %c0_i32_1 = arith.constant 0 : i32
    return %c0_i32, %c0_i32_0 : i32, i32
  }
  func.func @transform_3(%arg0: i32) -> (i32, i32) {
    %c0_i32 = arith.constant 0 : i32
    %c0_i32_0 = arith.constant 0 : i32
    %c0_i32_1 = arith.constant 0 : i32
    return %c0_i32, %c0_i32_0 : i32, i32
  }
  func.func @transform_4(%arg0: i32) -> (i32, i32) {
    %c0_i32 = arith.constant 0 : i32
    %c0_i32_0 = arith.constant 0 : i32
    %c0_i32_1 = arith.constant 0 : i32
    return %c0_i32, %c0_i32_0 : i32, i32
  }
  func.func @transform_5(%arg0: i32) -> (i32, i32) {
    %c0_i32 = arith.constant 0 : i32
    %c0_i32_0 = arith.constant 0 : i32
    return %arg0, %c0_i32 : i32, i32
  }
}

</mosaic_0001>

<llo_original>
// kernel: dnn_random_fit_forward.1
$region0: #{dnn_random_fit_forward.1}
  #allocation0 [shape = 'u32[]', space=smem, size = 0x4, offset = 0x4, fixed_abs, tag = 'smem constant byte address 0x4 - core index']
  #allocation1 [shape = 'u32[72,128]{1,0:T(1,128)}', space=vmem, size = 0x9000, scoped, tag = 'internal scratch']
  %s0 = inlined_call_operand.vmem [shape: f32[16,784], index: 0, kind: input, shape index: {}]
  %s1 = inlined_call_operand.hbm [shape: bf16[784,512], index: 1, kind: input, shape index: {}]
  %s2 = inlined_call_operand.vmem [shape: f32[1,512], index: 2, kind: input, shape index: {}]
  %s3 = inlined_call_operand.vmem [shape: bf16[512,128], index: 3, kind: input, shape index: {}]
  %s4 = inlined_call_operand.vmem [shape: f32[1,128], index: 4, kind: input, shape index: {}]
  %s5 = inlined_call_operand.vmem [shape: bf16[16,128], index: 5, kind: output, shape index: {}]
  %s6 = sld [smem:[#allocation0]]
  $region34: #{dnn_random_fit_forward.1} parent=0
    _
  %s8 = ssub.s32 1, %s6
  %s9 = scalar_select 0, %s8, %s6
  $region1: #{dnn_random_fit_forward.1} parent=0
    #allocation2 [shape = 'u8[802816]{0}', space=vmem, size = 0xc4000, scoped, tag = 'input window, operand 1, single buffered']
    #allocation3 [shape = 's32[1]{0}', space=sflag, size = 0x4, scoped, tag = 'scoped memory for dnn_random_fit_forward.1']
    %10 = vsyncpa [#allocation3], 0
    // Predicated region
    $region2: #{dnn_random_fit_forward.1} parent=1 // pred_check
      _
    $region3: #{dnn_random_fit_forward.1} parent=1 // pred_check_branch
      %12 = sbr.rel (0) target = $region5
    $region4: #{dnn_random_fit_forward.1} parent=1 // pred_region
      _
    $region5: #{dnn_random_fit_forward.1} parent=1 // pred_fallthru
      _
    // Predicated region
    $region6: #{dnn_random_fit_forward.1} parent=1 // pred_check
      _
    $region7: #{dnn_random_fit_forward.1} parent=1 // pred_check_branch
      %14 = sbr.rel (0) target = $region9
    $region8: #{dnn_random_fit_forward.1} parent=1 // pred_region
      %16 = vsyncadd [#allocation3], 0
      %s17 = sshll.u32 %s1, 4
      %s18 = int_to_ptr.hbm [resolvable:$true] %s17
      %s19 = sshll.u32 [#allocation2], 4
      %s20 = int_to_ptr.vmem [resolvable:$true] %s19
      %25 = dma.hbm_to_vmem [thread:$0]  %s18, 25088, %s20, [#allocation3], 256, 256, 16
    $region9: #{dnn_random_fit_forward.1} parent=1 // pred_fallthru
      _
    // Predicated region
    $region10: #{dnn_random_fit_forward.1} parent=1 // pred_check
      _
    $region11: #{dnn_random_fit_forward.1} parent=1 // pred_check_branch
      %27 = sbr.rel (0) target = $region13
    $region12: #{dnn_random_fit_forward.1} parent=1 // pred_region
      _
    $region13: #{dnn_random_fit_forward.1} parent=1 // pred_fallthru
      _
    // Predicated region
    $region14: #{dnn_random_fit_forward.1} parent=1 // pred_check
      _
    $region15: #{dnn_random_fit_forward.1} parent=1 // pred_check_branch
      %29 = sbr.rel (0) target = $region17
    $region16: #{dnn_random_fit_forward.1} parent=1 // pred_region
      _
    $region17: #{dnn_random_fit_forward.1} parent=1 // pred_fallthru
      _
    // Predicated region
    $region18: #{dnn_random_fit_forward.1} parent=1 // pred_check
      _
    $region19: #{dnn_random_fit_forward.1} parent=1 // pred_check_branch
      %31 = sbr.rel (0) target = $region21
    $region20: #{dnn_random_fit_forward.1} parent=1 // pred_region
      _
    $region21: #{dnn_random_fit_forward.1} parent=1 // pred_fallthru
      _
    // Predicated region
    $region22: #{dnn_random_fit_forward.1} parent=1 // pred_check
      _
    $region23: #{dnn_random_fit_forward.1} parent=1 // pred_check_branch
      %33 = sbr.rel (0) target = $region25
    $region24: #{dnn_random_fit_forward.1} parent=1 // pred_region
      %35 = dma.done [#allocation3], 25088
    $region25: #{dnn_random_fit_forward.1} parent=1 // pred_fallthru
      _
    %v37 = vld [vmem:[%s0] sm:$0xff]
    %v38 = vld [vmem:[%s0 + $0x8] sm:$0xff]
    %v39 = vld [vmem:[%s0 + $0x10] sm:$0xff]
    %v40 = vld [vmem:[%s0 + $0x18] sm:$0xff]
    %v41 = vld [vmem:[%s0 + $0x20] sm:$0xff]
    %v42 = vld [vmem:[%s0 + $0x28] sm:$0xff]
    %v43 = vld [vmem:[%s0 + $0x30] sm:$0xff]
    %v44 = vld [vmem:[%s0 + $0x38] sm:$0xff]
    %v45 = vld [vmem:[%s0 + $0x40] sm:$0xff]
    %v46 = vld [vmem:[%s0 + $0x48] sm:$0xff]
    %v47 = vld [vmem:[%s0 + $0x50] sm:$0xff]
    %v48 = vld [vmem:[%s0 + $0x58] sm:$0xff]
    %v49 = vld [vmem:[%s0 + $0x60] sm:$0xff]
    %v50 = vld [vmem:[%s0 + $0x68] sm:$0xff]
    %v51 = vpack.c.bf16 %v44, %v37
    %v52 = vpack.c.bf16 %v45, %v38
    %v53 = vpack.c.bf16 %v46, %v39
    %v54 = vpack.c.bf16 %v47, %v40
    %v55 = vpack.c.bf16 %v48, %v41
    %v56 = vpack.c.bf16 %v49, %v42
    %v57 = vpack.c.bf16 %v50, %v43
    %v58 = vld [vmem:[#allocation2] sm:$0xff]
    %v59 = vld [vmem:[#allocation2 + $0x8] sm:$0xff]
    %v60 = vld [vmem:[#allocation2 + $0x10] sm:$0xff]
    %v61 = vld [vmem:[#allocation2 + $0x18] sm:$0xff]
    %v62 = vld [vmem:[#allocation2 + $0x20] sm:$0xff]
    %v63 = vld [vmem:[#allocation2 + $0x28] sm:$0xff]
    %v64 = vld [vmem:[#allocation2 + $0x30] sm:$0xff]
    %v65 = vld [vmem:[#allocation2 + $0x38] sm:$0xff]
    %v66 = vld [vmem:[#allocation2 + $0x40] sm:$0xff]
    %v67 = vld [vmem:[#allocation2 + $0x48] sm:$0xff]
    %v68 = vld [vmem:[#allocation2 + $0x50] sm:$0xff]
    %v69 = vld [vmem:[#allocation2 + $0x58] sm:$0xff]
    %v70 = vld [vmem:[#allocation2 + $0x60] sm:$0xff]
    %v71 = vld [vmem:[#allocation2 + $0x68] sm:$0xff]
    %v72 = vld [vmem:[#allocation2 + $0x70] sm:$0xff]
    %v73 = vld [vmem:[#allocation2 + $0x78] sm:$0xff]
    %v74 = vld [vmem:[#allocation2 + $0x80] sm:$0xff]
    %v75 = vld [vmem:[#allocation2 + $0x88] sm:$0xff]
    %v76 = vld [vmem:[#allocation2 + $0x90] sm:$0xff]
    %v77 = vld [vmem:[#allocation2 + $0x98] sm:$0xff]
    %v78 = vld [vmem:[#allocation2 + $0xa0] sm:$0xff]
    %v79 = vld [vmem:[#allocation2 + $0xa8] sm:$0xff]
    %v80 = vld [vmem:[#allocation2 + $0xb0] sm:$0xff]
    %v81 = vld [vmem:[#allocation2 + $0xb8] sm:$0xff]
    %v82 = vld [vmem:[#allocation2 + $0xc0] sm:$0xff]
    %v83 = vld [vmem:[#allocation2 + $0xc8] sm:$0xff]
    %v84 = vld [vmem:[#allocation2 + $0xd0] sm:$0xff]
    %v85 = vld [vmem:[#allocation2 + $0xd8] sm:$0xff]
    %v86 = vld [vmem:[#allocation2 + $0xe0] sm:$0xff]
    %v87 = vld [vmem:[#allocation2 + $0xe8] sm:$0xff]
    %v88 = vld [vmem:[#allocation2 + $0xf0] sm:$0xff]
    %v89 = vld [vmem:[#allocation2 + $0xf8] sm:$0xff]
    %v90 = vld [vmem:[#allocation2 + $0x100] sm:$0xff]
    %v91 = vld [vmem:[#allocation2 + $0x108] sm:$0xff]
    %v92 = vld [vmem:[#allocation2 + $0x110] sm:$0xff]
    %v93 = vld [vmem:[#allocation2 + $0x118] sm:$0xff]
    %v94 = vld [vmem:[#allocation2 + $0x120] sm:$0xff]
    %v95 = vld [vmem:[#allocation2 + $0x128] sm:$0xff]
    %v96 = vld [vmem:[#allocation2 + $0x130] sm:$0xff]
    %v97 = vld [vmem:[#allocation2 + $0x138] sm:$0xff]
    %v98 = vld [vmem:[#allocation2 + $0x140] sm:$0xff]
    %v99 = vld [vmem:[#allocation2 + $0x148] sm:$0xff]
    %v100 = vld [vmem:[#allocation2 + $0x150] sm:$0xff]
    %v101 = vld [vmem:[#allocation2 + $0x158] sm:$0xff]
    %v102 = vld [vmem:[#allocation2 + $0x160] sm:$0xff]
    %v103 = vld [vmem:[#allocation2 + $0x168] sm:$0xff]
    %v104 = vld [vmem:[#allocation2 + $0x170] sm:$0xff]
    %v105 = vld [vmem:[#allocation2 + $0x178] sm:$0xff]
    %v106 = vld [vmem:[#allocation2 + $0x180] sm:$0xff]
    %v107 = vld [vmem:[#allocation2 + $0x188] sm:$0xff]
    %v108 = vld [vmem:[#allocation2 + $0x190] sm:$0xff]
    %v109 = vld [vmem:[#allocation2 + $0x198] sm:$0xff]
    %v110 = vld [vmem:[#allocation2 + $0x1a0] sm:$0xff]
    %v111 = vld [vmem:[#allocation2 + $0x1a8] sm:$0xff]
    %v112 = vld [vmem:[#allocation2 + $0x1b0] sm:$0xff]
    %v113 = vld [vmem:[#allocation2 + $0x1b8] sm:$0xff]
    %v114 = vld [vmem:[#allocation2 + $0x1c0] sm:$0xff]
    %v115 = vld [vmem:[#allocation2 + $0x1c8] sm:$0xff]
    %v116 = vld [vmem:[#allocation2 + $0x1d0] sm:$0xff]
    %v117 = vld [vmem:[#allocation2 + $0x1d8] sm:$0xff]
    %v118 = vld [vmem:[#allocation2 + $0x1e0] sm:$0xff]
    %v119 = vld [vmem:[#allocation2 + $0x1e8] sm:$0xff]
    %v120 = vld [vmem:[#allocation2 + $0x1f0] sm:$0xff]
    %v121 = vld [vmem:[#allocation2 + $0x1f8] sm:$0xff]
    %v122 = vld [vmem:[#allocation2 + $0x200] sm:$0xff]
    %v123 = vld [vmem:[#allocation2 + $0x208] sm:$0xff]
    %v124 = vld [vmem:[#allocation2 + $0x210] sm:$0xff]
    %v125 = vld [vmem:[#allocation2 + $0x218] sm:$0xff]
    %v126 = vld [vmem:[#allocation2 + $0x220] sm:$0xff]
    %v127 = vld [vmem:[#allocation2 + $0x228] sm:$0xff]
    %v128 = vld [vmem:[#allocation2 + $0x230] sm:$0xff]
    %v129 = vld [vmem:[#allocation2 + $0x238] sm:$0xff]
    %v130 = vld [vmem:[#allocation2 + $0x240] sm:$0xff]
    %v131 = vld [vmem:[#allocation2 + $0x248] sm:$0xff]
    %v132 = vld [vmem:[#allocation2 + $0x250] sm:$0xff]
    %v133 = vld [vmem:[#allocation2 + $0x258] sm:$0xff]
    %v134 = vld [vmem:[#allocation2 + $0x260] sm:$0xff]
    %v135 = vld [vmem:[#allocation2 + $0x268] sm:$0xff]
    %v136 = vld [vmem:[#allocation2 + $0x270] sm:$0xff]
    %v137 = vld [vmem:[#allocation2 + $0x278] sm:$0xff]
    %v138 = vld [vmem:[#allocation2 + $0x280] sm:$0xff]
    %v139 = vld [vmem:[#allocation2 + $0x288] sm:$0xff]
    %v140 = vld [vmem:[#allocation2 + $0x290] sm:$0xff]
    %v141 = vld [vmem:[#allocation2 + $0x298] sm:$0xff]
    %v142 = vld [vmem:[#allocation2 + $0x2a0] sm:$0xff]
    %v143 = vld [vmem:[#allocation2 + $0x2a8] sm:$0xff]
    %v144 = vld [vmem:[#allocation2 + $0x2b0] sm:$0xff]
    %v145 = vld [vmem:[#allocation2 + $0x2b8] sm:$0xff]
    %v146 = vld [vmem:[#allocation2 + $0x2c0] sm:$0xff]
    %v147 = vld [vmem:[#allocation2 + $0x2c8] sm:$0xff]
    %v148 = vld [vmem:[#allocation2 + $0x2d0] sm:$0xff]
    %v149 = vld [vmem:[#allocation2 + $0x2d8] sm:$0xff]
    %v150 = vld [vmem:[#allocation2 + $0x2e0] sm:$0xff]
    %v151 = vld [vmem:[#allocation2 + $0x2e8] sm:$0xff]
    %v152 = vld [vmem:[#allocation2 + $0x2f0] sm:$0xff]
    %v153 = vld [vmem:[#allocation2 + $0x2f8] sm:$0xff]
    %v154 = vld [vmem:[#allocation2 + $0x300] sm:$0xff]
    %v155 = vld [vmem:[#allocation2 + $0x308] sm:$0xff]
    %v156 = vld [vmem:[#allocation2 + $0x310] sm:$0xff]
    %v157 = vld [vmem:[#allocation2 + $0x318] sm:$0xff]
    %v158 = vld [vmem:[#allocation2 + $0x320] sm:$0xff]
    %v159 = vld [vmem:[#allocation2 + $0x328] sm:$0xff]
    %v160 = vld [vmem:[#allocation2 + $0x330] sm:$0xff]
    %v161 = vld [vmem:[#allocation2 + $0x338] sm:$0xff]
    %v162 = vld [vmem:[#allocation2 + $0x340] sm:$0xff]
    %v163 = vld [vmem:[#allocation2 + $0x348] sm:$0xff]
    %v164 = vld [vmem:[#allocation2 + $0x350] sm:$0xff]
    %v165 = vld [vmem:[#allocation2 + $0x358] sm:$0xff]
    %v166 = vld [vmem:[#allocation2 + $0x360] sm:$0xff]
    %v167 = vld [vmem:[#allocation2 + $0x368] sm:$0xff]
    %v168 = vld [vmem:[#allocation2 + $0x370] sm:$0xff]
    %v169 = vld [vmem:[#allocation2 + $0x378] sm:$0xff]
    %v170 = vld [vmem:[#allocation2 + $0x380] sm:$0xff]
    %v171 = vld [vmem:[#allocation2 + $0x388] sm:$0xff]
    %v172 = vld [vmem:[#allocation2 + $0x390] sm:$0xff]
    %v173 = vld [vmem:[#allocation2 + $0x398] sm:$0xff]
    %v174 = vld [vmem:[#allocation2 + $0x3a0] sm:$0xff]
    %v175 = vld [vmem:[#allocation2 + $0x3a8] sm:$0xff]
    %v176 = vld [vmem:[#allocation2 + $0x3b0] sm:$0xff]
    %v177 = vld [vmem:[#allocation2 + $0x3b8] sm:$0xff]
    %v178 = vld [vmem:[#allocation2 + $0x3c0] sm:$0xff]
    %v179 = vld [vmem:[#allocation2 + $0x3c8] sm:$0xff]
    %v180 = vld [vmem:[#allocation2 + $0x3d0] sm:$0xff]
    %v181 = vld [vmem:[#allocation2 + $0x3d8] sm:$0xff]
    %v182 = vld [vmem:[#allocation2 + $0x3e0] sm:$0xff]
    %v183 = vld [vmem:[#allocation2 + $0x3e8] sm:$0xff]
    %v184 = vld [vmem:[#allocation2 + $0x3f0] sm:$0xff]
    %v185 = vld [vmem:[#allocation2 + $0x3f8] sm:$0xff]
    %v186 = vld [vmem:[#allocation2 + $0x400] sm:$0xff]
    %v187 = vld [vmem:[#allocation2 + $0x408] sm:$0xff]
    %v188 = vld [vmem:[#allocation2 + $0x410] sm:$0xff]
    %v189 = vld [vmem:[#allocation2 + $0x418] sm:$0xff]
    %v190 = vld [vmem:[#allocation2 + $0x420] sm:$0xff]
    %v191 = vld [vmem:[#allocation2 + $0x428] sm:$0xff]
    %v192 = vld [vmem:[#allocation2 + $0x430] sm:$0xff]
    %v193 = vld [vmem:[#allocation2 + $0x438] sm:$0xff]
    %v194 = vld [vmem:[#allocation2 + $0x440] sm:$0xff]
    %v195 = vld [vmem:[#allocation2 + $0x448] sm:$0xff]
    %v196 = vld [vmem:[#allocation2 + $0x450] sm:$0xff]
    %v197 = vld [vmem:[#allocation2 + $0x458] sm:$0xff]
    %v198 = vld [vmem:[#allocation2 + $0x460] sm:$0xff]
    %v199 = vld [vmem:[#allocation2 + $0x468] sm:$0xff]
    %v200 = vld [vmem:[#allocation2 + $0x470] sm:$0xff]
    %v201 = vld [vmem:[#allocation2 + $0x478] sm:$0xff]
    %v202 = vld [vmem:[#allocation2 + $0x480] sm:$0xff]
    %v203 = vld [vmem:[#allocation2 + $0x488] sm:$0xff]
    %v204 = vld [vmem:[#allocation2 + $0x490] sm:$0xff]
    %v205 = vld [vmem:[#allocation2 + $0x498] sm:$0xff]
    %v206 = vld [vmem:[#allocation2 + $0x4a0] sm:$0xff]
    %v207 = vld [vmem:[#allocation2 + $0x4a8] sm:$0xff]
    %v208 = vld [vmem:[#allocation2 + $0x4b0] sm:$0xff]
    %v209 = vld [vmem:[#allocation2 + $0x4b8] sm:$0xff]
    %v210 = vld [vmem:[#allocation2 + $0x4c0] sm:$0xff]
    %v211 = vld [vmem:[#allocation2 + $0x4c8] sm:$0xff]
    %v212 = vld [vmem:[#allocation2 + $0x4d0] sm:$0xff]
    %v213 = vld [vmem:[#allocation2 + $0x4d8] sm:$0xff]
    %v214 = vld [vmem:[#allocation2 + $0x4e0] sm:$0xff]
    %v215 = vld [vmem:[#allocation2 + $0x4e8] sm:$0xff]
    %v216 = vld [vmem:[#allocation2 + $0x4f0] sm:$0xff]
    %v217 = vld [vmem:[#allocation2 + $0x4f8] sm:$0xff]
    %v218 = vld [vmem:[#allocation2 + $0x500] sm:$0xff]
    %v219 = vld [vmem:[#allocation2 + $0x508] sm:$0xff]
    %v220 = vld [vmem:[#allocation2 + $0x510] sm:$0xff]
    %v221 = vld [vmem:[#allocation2 + $0x518] sm:$0xff]
    %v222 = vld [vmem:[#allocation2 + $0x520] sm:$0xff]
    %v223 = vld [vmem:[#allocation2 + $0x528] sm:$0xff]
    %v224 = vld [vmem:[#allocation2 + $0x530] sm:$0xff]
    %v225 = vld [vmem:[#allocation2 + $0x538] sm:$0xff]
    %v226 = vld [vmem:[#allocation2 + $0x540] sm:$0xff]
    %v227 = vld [vmem:[#allocation2 + $0x548] sm:$0xff]
    %v228 = vld [vmem:[#allocation2 + $0x550] sm:$0xff]
    %v229 = vld [vmem:[#allocation2 + $0x558] sm:$0xff]
    %v230 = vld [vmem:[#allocation2 + $0x560] sm:$0xff]
    %v231 = vld [vmem:[#allocation2 + $0x568] sm:$0xff]
    %v232 = vld [vmem:[#allocation2 + $0x570] sm:$0xff]
    %v233 = vld [vmem:[#allocation2 + $0x578] sm:$0xff]
    %v234 = vld [vmem:[#allocation2 + $0x580] sm:$0xff]
    %v235 = vld [vmem:[#allocation2 + $0x588] sm:$0xff]
    %v236 = vld [vmem:[#allocation2 + $0x590] sm:$0xff]
    %v237 = vld [vmem:[#allocation2 + $0x598] sm:$0xff]
    %v238 = vld [vmem:[#allocation2 + $0x5a0] sm:$0xff]
    %v239 = vld [vmem:[#allocation2 + $0x5a8] sm:$0xff]
    %v240 = vld [vmem:[#allocation2 + $0x5b0] sm:$0xff]
    %v241 = vld [vmem:[#allocation2 + $0x5b8] sm:$0xff]
    %v242 = vld [vmem:[#allocation2 + $0x5c0] sm:$0xff]
    %v243 = vld [vmem:[#allocation2 + $0x5c8] sm:$0xff]
    %v244 = vld [vmem:[#allocation2 + $0x5d0] sm:$0xff]
    %v245 = vld [vmem:[#allocation2 + $0x5d8] sm:$0xff]
    %v246 = vld [vmem:[#allocation2 + $0x5e0] sm:$0xff]
    %v247 = vld [vmem:[#allocation2 + $0x5e8] sm:$0xff]
    %v248 = vld [vmem:[#allocation2 + $0x5f0] sm:$0xff]
    %v249 = vld [vmem:[#allocation2 + $0x5f8] sm:$0xff]
    %v250 = vld [vmem:[#allocation2 + $0x600] sm:$0xff]
    %v251 = vld [vmem:[#allocation2 + $0x608] sm:$0xff]
    %v252 = vld [vmem:[#allocation2 + $0x610] sm:$0xff]
    %v253 = vld [vmem:[#allocation2 + $0x618] sm:$0xff]
    %v254 = vld [vmem:[%s2] sm:$0xf]
    %v256 = vperm.slane %v254, 0
    %v257 = vperm.slane %v254, 1
    %v258 = vperm.slane %v254, 2
    %v259 = vperm.slane %v254, 3
    %v460 = vunpack.c.l.b16 %v58
    %v461 = vunpack.c.h.b16 %v58
    %v462 = vunpack.c.l.b16 %v59
    %v463 = vunpack.c.h.b16 %v59
    %v464 = vunpack.c.l.b16 %v60
    %v465 = vunpack.c.h.b16 %v60
    %v466 = vunpack.c.l.b16 %v61
    %v467 = vunpack.c.h.b16 %v61
    %v468 = vunpack.c.l.b16 %v62
    %v469 = vunpack.c.h.b16 %v62
    %v470 = vunpack.c.l.b16 %v63
    %v471 = vunpack.c.h.b16 %v63
    %v472 = vunpack.c.l.b16 %v64
    %v473 = vunpack.c.h.b16 %v64
    %v474 = vunpack.c.l.b16 %v65
    %v475 = vunpack.c.h.b16 %v65
    %v476 = vunpack.c.l.b16 %v66
    %v477 = vunpack.c.h.b16 %v66
    %v478 = vunpack.c.l.b16 %v67
    %v479 = vunpack.c.h.b16 %v67
    %v480 = vunpack.c.l.b16 %v68
    %v481 = vunpack.c.h.b16 %v68
    %v482 = vunpack.c.l.b16 %v69
    %v483 = vunpack.c.h.b16 %v69
    %v484 = vunpack.c.l.b16 %v70
    %v485 = vunpack.c.h.b16 %v70
    %v486 = vunpack.c.l.b16 %v71
    %v487 = vunpack.c.h.b16 %v71
    %v488 = vunpack.c.l.b16 %v72
    %v489 = vunpack.c.h.b16 %v72
    %v490 = vunpack.c.l.b16 %v73
    %v491 = vunpack.c.h.b16 %v73
    %v492 = vunpack.c.l.b16 %v74
    %v493 = vunpack.c.h.b16 %v74
    %v494 = vunpack.c.l.b16 %v75
    %v495 = vunpack.c.h.b16 %v75
    %v496 = vunpack.c.l.b16 %v76
    %v497 = vunpack.c.h.b16 %v76
    %v498 = vunpack.c.l.b16 %v77
    %v499 = vunpack.c.h.b16 %v77
    %v500 = vunpack.c.l.b16 %v78
    %v501 = vunpack.c.h.b16 %v78
    %v502 = vunpack.c.l.b16 %v79
    %v503 = vunpack.c.h.b16 %v79
    %v504 = vunpack.c.l.b16 %v80
    %v505 = vunpack.c.h.b16 %v80
    %v506 = vunpack.c.l.b16 %v81
    %v507 = vunpack.c.h.b16 %v81
    %v508 = vunpack.c.l.b16 %v82
    %v509 = vunpack.c.h.b16 %v82
    %v510 = vunpack.c.l.b16 %v83
    %v511 = vunpack.c.h.b16 %v83
    %v512 = vunpack.c.l.b16 %v84
    %v513 = vunpack.c.h.b16 %v84
    %v514 = vunpack.c.l.b16 %v85
    %v515 = vunpack.c.h.b16 %v85
    %v516 = vunpack.c.l.b16 %v86
    %v517 = vunpack.c.h.b16 %v86
    %v518 = vunpack.c.l.b16 %v87
    %v519 = vunpack.c.h.b16 %v87
    %v520 = vunpack.c.l.b16 %v88
    %v521 = vunpack.c.h.b16 %v88
    %v522 = vunpack.c.l.b16 %v89
    %v523 = vunpack.c.h.b16 %v89
    %v524 = vunpack.c.l.b16 %v90
    %v525 = vunpack.c.h.b16 %v90
    %v526 = vunpack.c.l.b16 %v91
    %v527 = vunpack.c.h.b16 %v91
    %v528 = vunpack.c.l.b16 %v92
    %v529 = vunpack.c.h.b16 %v92
    %v530 = vunpack.c.l.b16 %v93
    %v531 = vunpack.c.h.b16 %v93
    %v532 = vunpack.c.l.b16 %v94
    %v533 = vunpack.c.h.b16 %v94
    %v534 = vunpack.c.l.b16 %v95
    %v535 = vunpack.c.h.b16 %v95
    %v536 = vunpack.c.l.b16 %v96
    %v537 = vunpack.c.h.b16 %v96
    %v538 = vunpack.c.l.b16 %v97
    %v539 = vunpack.c.h.b16 %v97
    %v540 = vunpack.c.l.b16 %v98
    %v541 = vunpack.c.h.b16 %v98
    %v542 = vunpack.c.l.b16 %v99
    %v543 = vunpack.c.h.b16 %v99
    %v544 = vunpack.c.l.b16 %v100
    %v545 = vunpack.c.h.b16 %v100
    %v546 = vunpack.c.l.b16 %v101
    %v547 = vunpack.c.h.b16 %v101
    %v548 = vunpack.c.l.b16 %v102
    %v549 = vunpack.c.h.b16 %v102
    %v550 = vunpack.c.l.b16 %v103
    %v551 = vunpack.c.h.b16 %v103
    %v552 = vunpack.c.l.b16 %v104
    %v553 = vunpack.c.h.b16 %v104
    %v554 = vunpack.c.l.b16 %v105
    %v555 = vunpack.c.h.b16 %v105
    %v556 = vunpack.c.l.b16 %v106
    %v557 = vunpack.c.h.b16 %v106
    %v558 = vunpack.c.l.b16 %v107
    %v559 = vunpack.c.h.b16 %v107
    %v560 = vunpack.c.l.b16 %v108
    %v561 = vunpack.c.h.b16 %v108
    %v562 = vunpack.c.l.b16 %v109
    %v563 = vunpack.c.h.b16 %v109
    %v564 = vunpack.c.l.b16 %v110
    %v565 = vunpack.c.h.b16 %v110
    %v566 = vunpack.c.l.b16 %v111
    %v567 = vunpack.c.h.b16 %v111
    %v568 = vunpack.c.l.b16 %v112
    %v569 = vunpack.c.h.b16 %v112
    %v570 = vunpack.c.l.b16 %v113
    %v571 = vunpack.c.h.b16 %v113
    %v572 = vunpack.c.l.b16 %v114
    %v573 = vunpack.c.h.b16 %v114
    %v574 = vunpack.c.l.b16 %v115
    %v575 = vunpack.c.h.b16 %v115
    %v576 = vunpack.c.l.b16 %v116
    %v577 = vunpack.c.h.b16 %v116
    %v578 = vunpack.c.l.b16 %v117
    %v579 = vunpack.c.h.b16 %v117
    %v580 = vunpack.c.l.b16 %v118
    %v581 = vunpack.c.h.b16 %v118
    %v582 = vunpack.c.l.b16 %v119
    %v583 = vunpack.c.h.b16 %v119
    %v584 = vunpack.c.l.b16 %v120
    %v585 = vunpack.c.h.b16 %v120
    %v586 = vunpack.c.l.b16 %v121
    %v587 = vunpack.c.h.b16 %v121
    %v588 = vunpack.c.l.b16 %v122
    %v589 = vunpack.c.h.b16 %v122
    %v590 = vunpack.c.l.b16 %v123
    %v591 = vunpack.c.h.b16 %v123
    %v592 = vunpack.c.l.b16 %v124
    %v593 = vunpack.c.h.b16 %v124
    %v594 = vunpack.c.l.b16 %v125
    %v595 = vunpack.c.h.b16 %v125
    %v596 = vunpack.c.l.b16 %v126
    %v597 = vunpack.c.h.b16 %v126
    %v598 = vunpack.c.l.b16 %v127
    %v599 = vunpack.c.h.b16 %v127
    %v600 = vunpack.c.l.b16 %v128
    %v601 = vunpack.c.h.b16 %v128
    %v602 = vunpack.c.l.b16 %v129
    %v603 = vunpack.c.h.b16 %v129
    %v604 = vunpack.c.l.b16 %v130
    %v605 = vunpack.c.h.b16 %v130
    %v606 = vunpack.c.l.b16 %v131
    %v607 = vunpack.c.h.b16 %v131
    %v608 = vunpack.c.l.b16 %v132
    %v609 = vunpack.c.h.b16 %v132
    %v610 = vunpack.c.l.b16 %v133
    %v611 = vunpack.c.h.b16 %v133
    %v612 = vunpack.c.l.b16 %v134
    %v613 = vunpack.c.h.b16 %v134
    %v614 = vunpack.c.l.b16 %v135
    %v615 = vunpack.c.h.b16 %v135
    %v616 = vunpack.c.l.b16 %v136
    %v617 = vunpack.c.h.b16 %v136
    %v618 = vunpack.c.l.b16 %v137
    %v619 = vunpack.c.h.b16 %v137
    %v620 = vunpack.c.l.b16 %v138
    %v621 = vunpack.c.h.b16 %v138
    %v622 = vunpack.c.l.b16 %v139
    %v623 = vunpack.c.h.b16 %v139
    %v624 = vunpack.c.l.b16 %v140
    %v625 = vunpack.c.h.b16 %v140
    %v626 = vunpack.c.l.b16 %v141
    %v627 = vunpack.c.h.b16 %v141
    %v628 = vunpack.c.l.b16 %v142
    %v629 = vunpack.c.h.b16 %v142
    %v630 = vunpack.c.l.b16 %v143
    %v631 = vunpack.c.h.b16 %v143
    %v632 = vunpack.c.l.b16 %v144
    %v633 = vunpack.c.h.b16 %v144
    %v634 = vunpack.c.l.b16 %v145
    %v635 = vunpack.c.h.b16 %v145
    %v636 = vunpack.c.l.b16 %v146
    %v637 = vunpack.c.h.b16 %v146
    %v638 = vunpack.c.l.b16 %v147
    %v639 = vunpack.c.h.b16 %v147
    %v640 = vunpack.c.l.b16 %v148
    %v641 = vunpack.c.h.b16 %v148
    %v642 = vunpack.c.l.b16 %v149
    %v643 = vunpack.c.h.b16 %v149
    %v644 = vunpack.c.l.b16 %v150
    %v645 = vunpack.c.h.b16 %v150
    %v646 = vunpack.c.l.b16 %v151
    %v647 = vunpack.c.h.b16 %v151
    %v648 = vunpack.c.l.b16 %v152
    %v649 = vunpack.c.h.b16 %v152
    %v650 = vunpack.c.l.b16 %v153
    %v651 = vunpack.c.h.b16 %v153
    %v652 = vunpack.c.l.b16 %v154
    %v653 = vunpack.c.h.b16 %v154
    %v654 = vunpack.c.l.b16 %v155
    %v655 = vunpack.c.h.b16 %v155
    %v656 = vunpack.c.l.b16 %v156
    %v657 = vunpack.c.h.b16 %v156
    %v658 = vunpack.c.l.b16 %v157
    %v659 = vunpack.c.h.b16 %v157
    %v660 = vunpack.c.l.b16 %v158
    %v661 = vunpack.c.h.b16 %v158
    %v662 = vunpack.c.l.b16 %v159
    %v663 = vunpack.c.h.b16 %v159
    %v664 = vunpack.c.l.b16 %v160
    %v665 = vunpack.c.h.b16 %v160
    %v666 = vunpack.c.l.b16 %v161
    %v667 = vunpack.c.h.b16 %v161
    %v668 = vunpack.c.l.b16 %v162
    %v669 = vunpack.c.h.b16 %v162
    %v670 = vunpack.c.l.b16 %v163
    %v671 = vunpack.c.h.b16 %v163
    %v672 = vunpack.c.l.b16 %v164
    %v673 = vunpack.c.h.b16 %v164
    %v674 = vunpack.c.l.b16 %v165
    %v675 = vunpack.c.h.b16 %v165
    %v676 = vunpack.c.l.b16 %v166
    %v677 = vunpack.c.h.b16 %v166
    %v678 = vunpack.c.l.b16 %v167
    %v679 = vunpack.c.h.b16 %v167
    %v680 = vunpack.c.l.b16 %v168
    %v681 = vunpack.c.h.b16 %v168
    %v682 = vunpack.c.l.b16 %v169
    %v683 = vunpack.c.h.b16 %v169
    %v684 = vunpack.c.l.b16 %v170
    %v685 = vunpack.c.h.b16 %v170
    %v686 = vunpack.c.l.b16 %v171
    %v687 = vunpack.c.h.b16 %v171
    %v688 = vunpack.c.l.b16 %v172
    %v689 = vunpack.c.h.b16 %v172
    %v690 = vunpack.c.l.b16 %v173
    %v691 = vunpack.c.h.b16 %v173
    %v692 = vunpack.c.l.b16 %v174
    %v693 = vunpack.c.h.b16 %v174
    %v694 = vunpack.c.l.b16 %v175
    %v695 = vunpack.c.h.b16 %v175
    %v696 = vunpack.c.l.b16 %v176
    %v697 = vunpack.c.h.b16 %v176
    %v698 = vunpack.c.l.b16 %v177
    %v699 = vunpack.c.h.b16 %v177
    %v700 = vunpack.c.l.b16 %v178
    %v701 = vunpack.c.h.b16 %v178
    %v702 = vunpack.c.l.b16 %v179
    %v703 = vunpack.c.h.b16 %v179
    %v704 = vunpack.c.l.b16 %v180
    %v705 = vunpack.c.h.b16 %v180
    %v706 = vunpack.c.l.b16 %v181
    %v707 = vunpack.c.h.b16 %v181
    %v708 = vunpack.c.l.b16 %v182
    %v709 = vunpack.c.h.b16 %v182
    %v710 = vunpack.c.l.b16 %v183
    %v711 = vunpack.c.h.b16 %v183
    %v712 = vunpack.c.l.b16 %v184
    %v713 = vunpack.c.h.b16 %v184
    %v714 = vunpack.c.l.b16 %v185
    %v715 = vunpack.c.h.b16 %v185
    %v716 = vunpack.c.l.b16 %v186
    %v717 = vunpack.c.h.b16 %v186
    %v718 = vunpack.c.l.b16 %v187
    %v719 = vunpack.c.h.b16 %v187
    %v720 = vunpack.c.l.b16 %v188
    %v721 = vunpack.c.h.b16 %v188
    %v722 = vunpack.c.l.b16 %v189
    %v723 = vunpack.c.h.b16 %v189
    %v724 = vunpack.c.l.b16 %v190
    %v725 = vunpack.c.h.b16 %v190
    %v726 = vunpack.c.l.b16 %v191
    %v727 = vunpack.c.h.b16 %v191
    %v728 = vunpack.c.l.b16 %v192
    %v729 = vunpack.c.h.b16 %v192
    %v730 = vunpack.c.l.b16 %v193
    %v731 = vunpack.c.h.b16 %v193
    %v732 = vunpack.c.l.b16 %v194
    %v733 = vunpack.c.h.b16 %v194
    %v734 = vunpack.c.l.b16 %v195
    %v735 = vunpack.c.h.b16 %v195
    %v736 = vunpack.c.l.b16 %v196
    %v737 = vunpack.c.h.b16 %v196
    %v738 = vunpack.c.l.b16 %v197
    %v739 = vunpack.c.h.b16 %v197
    %v740 = vunpack.c.l.b16 %v198
    %v741 = vunpack.c.h.b16 %v198
    %v742 = vunpack.c.l.b16 %v199
    %v743 = vunpack.c.h.b16 %v199
    %v744 = vunpack.c.l.b16 %v200
    %v745 = vunpack.c.h.b16 %v200
    %v746 = vunpack.c.l.b16 %v201
    %v747 = vunpack.c.h.b16 %v201
    %v748 = vunpack.c.l.b16 %v202
    %v749 = vunpack.c.h.b16 %v202
    %v750 = vunpack.c.l.b16 %v203
    %v751 = vunpack.c.h.b16 %v203
    %v752 = vunpack.c.l.b16 %v204
    %v753 = vunpack.c.h.b16 %v204
    %v754 = vunpack.c.l.b16 %v205
    %v755 = vunpack.c.h.b16 %v205
    %v756 = vunpack.c.l.b16 %v206
    %v757 = vunpack.c.h.b16 %v206
    %v758 = vunpack.c.l.b16 %v207
    %v759 = vunpack.c.h.b16 %v207
    %v760 = vunpack.c.l.b16 %v208
    %v761 = vunpack.c.h.b16 %v208
    %v762 = vunpack.c.l.b16 %v209
    %v763 = vunpack.c.h.b16 %v209
    %v764 = vunpack.c.l.b16 %v210
    %v765 = vunpack.c.h.b16 %v210
    %v766 = vunpack.c.l.b16 %v211
    %v767 = vunpack.c.h.b16 %v211
    %v768 = vunpack.c.l.b16 %v212
    %v769 = vunpack.c.h.b16 %v212
    %v770 = vunpack.c.l.b16 %v213
    %v771 = vunpack.c.h.b16 %v213
    %v772 = vunpack.c.l.b16 %v214
    %v773 = vunpack.c.h.b16 %v214
    %v774 = vunpack.c.l.b16 %v215
    %v775 = vunpack.c.h.b16 %v215
    %v776 = vunpack.c.l.b16 %v216
    %v777 = vunpack.c.h.b16 %v216
    %v778 = vunpack.c.l.b16 %v217
    %v779 = vunpack.c.h.b16 %v217
    %v780 = vunpack.c.l.b16 %v218
    %v781 = vunpack.c.h.b16 %v218
    %v782 = vunpack.c.l.b16 %v219
    %v783 = vunpack.c.h.b16 %v219
    %v784 = vunpack.c.l.b16 %v220
    %v785 = vunpack.c.h.b16 %v220
    %v786 = vunpack.c.l.b16 %v221
    %v787 = vunpack.c.h.b16 %v221
    %v788 = vunpack.c.l.b16 %v222
    %v789 = vunpack.c.h.b16 %v222
    %v790 = vunpack.c.l.b16 %v223
    %v791 = vunpack.c.h.b16 %v223
    %v792 = vunpack.c.l.b16 %v224
    %v793 = vunpack.c.h.b16 %v224
    %v794 = vunpack.c.l.b16 %v225
    %v795 = vunpack.c.h.b16 %v225
    %v796 = vunpack.c.l.b16 %v226
    %v797 = vunpack.c.h.b16 %v226
    %v798 = vunpack.c.l.b16 %v227
    %v799 = vunpack.c.h.b16 %v227
    %v800 = vunpack.c.l.b16 %v228
    %v801 = vunpack.c.h.b16 %v228
    %v802 = vunpack.c.l.b16 %v229
    %v803 = vunpack.c.h.b16 %v229
    %v804 = vunpack.c.l.b16 %v230
    %v805 = vunpack.c.h.b16 %v230
    %v806 = vunpack.c.l.b16 %v231
    %v807 = vunpack.c.h.b16 %v231
    %v808 = vunpack.c.l.b16 %v232
    %v809 = vunpack.c.h.b16 %v232
    %v810 = vunpack.c.l.b16 %v233
    %v811 = vunpack.c.h.b16 %v233
    %v812 = vunpack.c.l.b16 %v234
    %v813 = vunpack.c.h.b16 %v234
    %v814 = vunpack.c.l.b16 %v235
    %v815 = vunpack.c.h.b16 %v235
    %v816 = vunpack.c.l.b16 %v236
    %v817 = vunpack.c.h.b16 %v236
    %v818 = vunpack.c.l.b16 %v237
    %v819 = vunpack.c.h.b16 %v237
    %v820 = vunpack.c.l.b16 %v238
    %v821 = vunpack.c.h.b16 %v238
    %v822 = vunpack.c.l.b16 %v239
    %v823 = vunpack.c.h.b16 %v239
    %v824 = vunpack.c.l.b16 %v240
    %v825 = vunpack.c.h.b16 %v240
    %v826 = vunpack.c.l.b16 %v241
    %v827 = vunpack.c.h.b16 %v241
    %v828 = vunpack.c.l.b16 %v242
    %v829 = vunpack.c.h.b16 %v242
    %v830 = vunpack.c.l.b16 %v243
    %v831 = vunpack.c.h.b16 %v243
    %v832 = vunpack.c.l.b16 %v244
    %v833 = vunpack.c.h.b16 %v244
    %v834 = vunpack.c.l.b16 %v245
    %v835 = vunpack.c.h.b16 %v245
    %v836 = vunpack.c.l.b16 %v246
    %v837 = vunpack.c.h.b16 %v246
    %v838 = vunpack.c.l.b16 %v247
    %v839 = vunpack.c.h.b16 %v247
    %v840 = vunpack.c.l.b16 %v248
    %v841 = vunpack.c.h.b16 %v248
    %v842 = vunpack.c.l.b16 %v249
    %v843 = vunpack.c.h.b16 %v249
    %v844 = vunpack.c.l.b16 %v250
    %v845 = vunpack.c.h.b16 %v250
    %v846 = vunpack.c.l.b16 %v251
    %v847 = vunpack.c.h.b16 %v251
    %v848 = vunpack.c.l.b16 %v252
    %v849 = vunpack.c.h.b16 %v252
    %v850 = vunpack.c.l.b16 %v253
    %v851 = vunpack.c.h.b16 %v253
    %v852 = vpack.c.b16 %v464, %v460
    %v853 = vpack.c.b16 %v465, %v461
    %v854 = vpack.c.b16 %v466, %v462
    %v855 = vpack.c.b16 %v467, %v463
    %v856 = vpack.c.b16 %v472, %v468
    %v857 = vpack.c.b16 %v473, %v469
    %v858 = vpack.c.b16 %v474, %v470
    %v859 = vpack.c.b16 %v475, %v471
    %v860 = vpack.c.b16 %v480, %v476
    %v861 = vpack.c.b16 %v481, %v477
    %v862 = vpack.c.b16 %v482, %v478
    %v863 = vpack.c.b16 %v483, %v479
    %v864 = vpack.c.b16 %v488, %v484
    %v865 = vpack.c.b16 %v489, %v485
    %v866 = vpack.c.b16 %v490, %v486
    %v867 = vpack.c.b16 %v491, %v487
    %v868 = vpack.c.b16 %v496, %v492
    %v869 = vpack.c.b16 %v497, %v493
    %v870 = vpack.c.b16 %v498, %v494
    %v871 = vpack.c.b16 %v499, %v495
    %v872 = vpack.c.b16 %v504, %v500
    %v873 = vpack.c.b16 %v505, %v501
    %v874 = vpack.c.b16 %v506, %v502
    %v875 = vpack.c.b16 %v507, %v503
    %v876 = vpack.c.b16 %v512, %v508
    %v877 = vpack.c.b16 %v513, %v509
    %v878 = vpack.c.b16 %v514, %v510
    %v879 = vpack.c.b16 %v515, %v511
    %v880 = vpack.c.b16 %v520, %v516
    %v881 = vpack.c.b16 %v521, %v517
    %v882 = vpack.c.b16 %v522, %v518
    %v883 = vpack.c.b16 %v523, %v519
    %v884 = vpack.c.b16 %v528, %v524
    %v885 = vpack.c.b16 %v529, %v525
    %v886 = vpack.c.b16 %v530, %v526
    %v887 = vpack.c.b16 %v531, %v527
    %v888 = vpack.c.b16 %v536, %v532
    %v889 = vpack.c.b16 %v537, %v533
    %v890 = vpack.c.b16 %v538, %v534
    %v891 = vpack.c.b16 %v539, %v535
    %v892 = vpack.c.b16 %v544, %v540
    %v893 = vpack.c.b16 %v545, %v541
    %v894 = vpack.c.b16 %v546, %v542
    %v895 = vpack.c.b16 %v547, %v543
    %v896 = vpack.c.b16 %v552, %v548
    %v897 = vpack.c.b16 %v553, %v549
    %v898 = vpack.c.b16 %v554, %v550
    %v899 = vpack.c.b16 %v555, %v551
    %v900 = vpack.c.b16 %v560, %v556
    %v901 = vpack.c.b16 %v561, %v557
    %v902 = vpack.c.b16 %v562, %v558
    %v903 = vpack.c.b16 %v563, %v559
    %v904 = vpack.c.b16 %v568, %v564
    %v905 = vpack.c.b16 %v569, %v565
    %v906 = vpack.c.b16 %v570, %v566
    %v907 = vpack.c.b16 %v571, %v567
    %v908 = vpack.c.b16 %v576, %v572
    %v909 = vpack.c.b16 %v577, %v573
    %v910 = vpack.c.b16 %v578, %v574
    %v911 = vpack.c.b16 %v579, %v575
    %v912 = vpack.c.b16 %v584, %v580
    %v913 = vpack.c.b16 %v585, %v581
    %v914 = vpack.c.b16 %v586, %v582
    %v915 = vpack.c.b16 %v587, %v583
    %v916 = vpack.c.b16 %v592, %v588
    %v917 = vpack.c.b16 %v593, %v589
    %v918 = vpack.c.b16 %v594, %v590
    %v919 = vpack.c.b16 %v595, %v591
    %v920 = vpack.c.b16 %v600, %v596
    %v921 = vpack.c.b16 %v601, %v597
    %v922 = vpack.c.b16 %v602, %v598
    %v923 = vpack.c.b16 %v603, %v599
    %v924 = vpack.c.b16 %v608, %v604
    %v925 = vpack.c.b16 %v609, %v605
    %v926 = vpack.c.b16 %v610, %v606
    %v927 = vpack.c.b16 %v611, %v607
    %v928 = vpack.c.b16 %v616, %v612
    %v929 = vpack.c.b16 %v617, %v613
    %v930 = vpack.c.b16 %v618, %v614
    %v931 = vpack.c.b16 %v619, %v615
    %v932 = vpack.c.b16 %v624, %v620
    %v933 = vpack.c.b16 %v625, %v621
    %v934 = vpack.c.b16 %v626, %v622
    %v935 = vpack.c.b16 %v627, %v623
    %v936 = vpack.c.b16 %v632, %v628
    %v937 = vpack.c.b16 %v633, %v629
    %v938 = vpack.c.b16 %v634, %v630
    %v939 = vpack.c.b16 %v635, %v631
    %v940 = vpack.c.b16 %v640, %v636
    %v941 = vpack.c.b16 %v641, %v637
    %v942 = vpack.c.b16 %v642, %v638
    %v943 = vpack.c.b16 %v643, %v639
    %v944 = vpack.c.b16 %v648, %v644
    %v945 = vpack.c.b16 %v649, %v645
    %v946 = vpack.c.b16 %v650, %v646
    %v947 = vpack.c.b16 %v651, %v647
    %v948 = vpack.c.b16 %v656, %v652
    %v949 = vpack.c.b16 %v657, %v653
    %v950 = vpack.c.b16 %v658, %v654
    %v951 = vpack.c.b16 %v659, %v655
    %v952 = vpack.c.b16 %v664, %v660
    %v953 = vpack.c.b16 %v665, %v661
    %v954 = vpack.c.b16 %v666, %v662
    %v955 = vpack.c.b16 %v667, %v663
    %v956 = vpack.c.b16 %v672, %v668
    %v957 = vpack.c.b16 %v673, %v669
    %v958 = vpack.c.b16 %v674, %v670
    %v959 = vpack.c.b16 %v675, %v671
    %v960 = vpack.c.b16 %v680, %v676
    %v961 = vpack.c.b16 %v681, %v677
    %v962 = vpack.c.b16 %v682, %v678
    %v963 = vpack.c.b16 %v683, %v679
    %v964 = vpack.c.b16 %v688, %v684
    %v965 = vpack.c.b16 %v689, %v685
    %v966 = vpack.c.b16 %v690, %v686
    %v967 = vpack.c.b16 %v691, %v687
    %v968 = vpack.c.b16 %v696, %v692
    %v969 = vpack.c.b16 %v697, %v693
    %v970 = vpack.c.b16 %v698, %v694
    %v971 = vpack.c.b16 %v699, %v695
    %v972 = vpack.c.b16 %v704, %v700
    %v973 = vpack.c.b16 %v705, %v701
    %v974 = vpack.c.b16 %v706, %v702
    %v975 = vpack.c.b16 %v707, %v703
    %v976 = vpack.c.b16 %v712, %v708
    %v977 = vpack.c.b16 %v713, %v709
    %v978 = vpack.c.b16 %v714, %v710
    %v979 = vpack.c.b16 %v715, %v711
    %v980 = vpack.c.b16 %v720, %v716
    %v981 = vpack.c.b16 %v721, %v717
    %v982 = vpack.c.b16 %v722, %v718
    %v983 = vpack.c.b16 %v723, %v719
    %v984 = vpack.c.b16 %v728, %v724
    %v985 = vpack.c.b16 %v729, %v725
    %v986 = vpack.c.b16 %v730, %v726
    %v987 = vpack.c.b16 %v731, %v727
    %v988 = vpack.c.b16 %v736, %v732
    %v989 = vpack.c.b16 %v737, %v733
    %v990 = vpack.c.b16 %v738, %v734
    %v991 = vpack.c.b16 %v739, %v735
    %v992 = vpack.c.b16 %v744, %v740
    %v993 = vpack.c.b16 %v745, %v741
    %v994 = vpack.c.b16 %v746, %v742
    %v995 = vpack.c.b16 %v747, %v743
    %v996 = vpack.c.b16 %v752, %v748
    %v997 = vpack.c.b16 %v753, %v749
    %v998 = vpack.c.b16 %v754, %v750
    %v999 = vpack.c.b16 %v755, %v751
    %v1000 = vpack.c.b16 %v760, %v756
    %v1001 = vpack.c.b16 %v761, %v757
    %v1002 = vpack.c.b16 %v762, %v758
    %v1003 = vpack.c.b16 %v763, %v759
    %v1004 = vpack.c.b16 %v768, %v764
    %v1005 = vpack.c.b16 %v769, %v765
    %v1006 = vpack.c.b16 %v770, %v766
    %v1007 = vpack.c.b16 %v771, %v767
    %v1008 = vpack.c.b16 %v776, %v772
    %v1009 = vpack.c.b16 %v777, %v773
    %v1010 = vpack.c.b16 %v778, %v774
    %v1011 = vpack.c.b16 %v779, %v775
    %v1012 = vpack.c.b16 %v784, %v780
    %v1013 = vpack.c.b16 %v785, %v781
    %v1014 = vpack.c.b16 %v786, %v782
    %v1015 = vpack.c.b16 %v787, %v783
    %v1016 = vpack.c.b16 %v792, %v788
    %v1017 = vpack.c.b16 %v793, %v789
    %v1018 = vpack.c.b16 %v794, %v790
    %v1019 = vpack.c.b16 %v795, %v791
    %v1020 = vpack.c.b16 %v800, %v796
    %v1021 = vpack.c.b16 %v801, %v797
    %v1022 = vpack.c.b16 %v802, %v798
    %v1023 = vpack.c.b16 %v803, %v799
    %v1024 = vpack.c.b16 %v808, %v804
    %v1025 = vpack.c.b16 %v809, %v805
    %v1026 = vpack.c.b16 %v810, %v806
    %v1027 = vpack.c.b16 %v811, %v807
    %v1028 = vpack.c.b16 %v816, %v812
    %v1029 = vpack.c.b16 %v817, %v813
    %v1030 = vpack.c.b16 %v818, %v814
    %v1031 = vpack.c.b16 %v819, %v815
    %v1032 = vpack.c.b16 %v824, %v820
    %v1033 = vpack.c.b16 %v825, %v821
    %v1034 = vpack.c.b16 %v826, %v822
    %v1035 = vpack.c.b16 %v827, %v823
    %v1036 = vpack.c.b16 %v832, %v828
    %v1037 = vpack.c.b16 %v833, %v829
    %v1038 = vpack.c.b16 %v834, %v830
    %v1039 = vpack.c.b16 %v835, %v831
    %v1040 = vpack.c.b16 %v840, %v836
    %v1041 = vpack.c.b16 %v841, %v837
    %v1042 = vpack.c.b16 %v842, %v838
    %v1043 = vpack.c.b16 %v843, %v839
    %v1044 = vpack.c.b16 %v848, %v844
    %v1045 = vpack.c.b16 %v849, %v845
    %v1046 = vpack.c.b16 %v850, %v846
    %v1047 = vpack.c.b16 %v851, %v847
    %vm1244 = vcmask 130048
    %v1246 = vsel %vm1244, %v57, 0
    %1248 = vmatpush.bf16.msra.mxu0 %v880
    %1249 = vmatpush.bf16.msra.mxu0 %v876
    %1250 = vmatpush.bf16.msra.mxu0 %v872
    %1251 = vmatpush.bf16.msra.mxu0 %v868
    %1252 = vmatpush.bf16.msra.mxu0 %v864
    %1253 = vmatpush.bf16.msra.mxu0 %v860
    %1254 = vmatpush.bf16.msra.mxu0 %v856
    %1255 = vmatpush.bf16.msra.mxu0 %v852
    %1256 = vmatmul.bf16.gmra.mxu0 %v51
    %v1257 = vpop.f32.mrf.mxu0
    %v1258 = vadd.f32 %v256, %v1257
    %v1259 = vpop.f32.mrf.mxu0
    %v1260 = vadd.f32 %v256, %v1259
    %1261 = vdwg.mxu0
    %1262 = vmatpush.bf16.msra.mxu0 %v912
    %1263 = vmatpush.bf16.msra.mxu0 %v908
    %1264 = vmatpush.bf16.msra.mxu0 %v904
    %1265 = vmatpush.bf16.msra.mxu0 %v900
    %1266 = vmatpush.bf16.msra.mxu0 %v896
    %1267 = vmatpush.bf16.msra.mxu0 %v892
    %1268 = vmatpush.bf16.msra.mxu0 %v888
    %1269 = vmatpush.bf16.msra.mxu0 %v884
    %1270 = vmatmul.bf16.gmra.mxu0 %v52
    %v1271 = vpop.f32.mrf.mxu0
    %v1272 = vadd.f32 %v1258, %v1271
    %v1273 = vpop.f32.mrf.mxu0
    %v1274 = vadd.f32 %v1260, %v1273
    %1275 = vdwg.mxu0
    %1276 = vmatpush.bf16.msra.mxu0 %v944
    %1277 = vmatpush.bf16.msra.mxu0 %v940
    %1278 = vmatpush.bf16.msra.mxu0 %v936
    %1279 = vmatpush.bf16.msra.mxu0 %v932
    %1280 = vmatpush.bf16.msra.mxu0 %v928
    %1281 = vmatpush.bf16.msra.mxu0 %v924
    %1282 = vmatpush.bf16.msra.mxu0 %v920
    %1283 = vmatpush.bf16.msra.mxu0 %v916
    %1284 = vmatmul.bf16.gmra.mxu0 %v53
    %v1285 = vpop.f32.mrf.mxu0
    %v1286 = vadd.f32 %v1272, %v1285
    %v1287 = vpop.f32.mrf.mxu0
    %v1288 = vadd.f32 %v1274, %v1287
    %1289 = vdwg.mxu0
    %1290 = vmatpush.bf16.msra.mxu0 %v976
    %1291 = vmatpush.bf16.msra.mxu0 %v972
    %1292 = vmatpush.bf16.msra.mxu0 %v968
    %1293 = vmatpush.bf16.msra.mxu0 %v964
    %1294 = vmatpush.bf16.msra.mxu0 %v960
    %1295 = vmatpush.bf16.msra.mxu0 %v956
    %1296 = vmatpush.bf16.msra.mxu0 %v952
    %1297 = vmatpush.bf16.msra.mxu0 %v948
    %1298 = vmatmul.bf16.gmra.mxu0 %v54
    %v1299 = vpop.f32.mrf.mxu0
    %v1300 = vadd.f32 %v1286, %v1299
    %v1301 = vpop.f32.mrf.mxu0
    %v1302 = vadd.f32 %v1288, %v1301
    %1303 = vdwg.mxu0
    %1304 = vmatpush.bf16.msra.mxu0 %v1008
    %1305 = vmatpush.bf16.msra.mxu0 %v1004
    %1306 = vmatpush.bf16.msra.mxu0 %v1000
    %1307 = vmatpush.bf16.msra.mxu0 %v996
    %1308 = vmatpush.bf16.msra.mxu0 %v992
    %1309 = vmatpush.bf16.msra.mxu0 %v988
    %1310 = vmatpush.bf16.msra.mxu0 %v984
    %1311 = vmatpush.bf16.msra.mxu0 %v980
    %1312 = vmatmul.bf16.gmra.mxu0 %v55
    %v1313 = vpop.f32.mrf.mxu0
    %v1314 = vadd.f32 %v1300, %v1313
    %v1315 = vpop.f32.mrf.mxu0
    %v1316 = vadd.f32 %v1302, %v1315
    %1317 = vdwg.mxu0
    %1318 = vmatpush.bf16.msra.mxu0 %v1040
    %1319 = vmatpush.bf16.msra.mxu0 %v1036
    %1320 = vmatpush.bf16.msra.mxu0 %v1032
    %1321 = vmatpush.bf16.msra.mxu0 %v1028
    %1322 = vmatpush.bf16.msra.mxu0 %v1024
    %1323 = vmatpush.bf16.msra.mxu0 %v1020
    %1324 = vmatpush.bf16.msra.mxu0 %v1016
    %1325 = vmatpush.bf16.msra.mxu0 %v1012
    %1326 = vmatmul.bf16.gmra.mxu0 %v56
    %v1327 = vpop.f32.mrf.mxu0
    %v1328 = vadd.f32 %v1314, %v1327
    %v1329 = vpop.f32.mrf.mxu0
    %v1330 = vadd.f32 %v1316, %v1329
    %1331 = vdwg.mxu0
    %1332 = vmatpush.bf16.msra.mxu0 0
    %1333 = vmatpush.bf16.msra.mxu0 0
    %1334 = vmatpush.bf16.msra.mxu0 0
    %1335 = vmatpush.bf16.msra.mxu0 0
    %1336 = vmatpush.bf16.msra.mxu0 0
    %1337 = vmatpush.bf16.msra.mxu0 0
    %1338 = vmatpush.bf16.msra.mxu0 0
    %1339 = vmatpush.bf16.msra.mxu0 %v1044
    %1340 = vmatmul.bf16.gmra.mxu0 %v1246
    %v1341 = vpop.f32.mrf.mxu0
    %v1342 = vadd.f32 %v1328, %v1341
    %v1343 = vpop.f32.mrf.mxu0
    %v1344 = vadd.f32 %v1330, %v1343
    %1345 = vdwg.mxu0
    %1346 = vmatpush.bf16.msra.mxu0 %v881
    %1347 = vmatpush.bf16.msra.mxu0 %v877
    %1348 = vmatpush.bf16.msra.mxu0 %v873
    %1349 = vmatpush.bf16.msra.mxu0 %v869
    %1350 = vmatpush.bf16.msra.mxu0 %v865
    %1351 = vmatpush.bf16.msra.mxu0 %v861
    %1352 = vmatpush.bf16.msra.mxu0 %v857
    %1353 = vmatpush.bf16.msra.mxu0 %v853
    %1354 = vmatmul.bf16.gmra.mxu0 %v51
    %v1355 = vpop.f32.mrf.mxu0
    %v1356 = vadd.f32 %v257, %v1355
    %v1357 = vpop.f32.mrf.mxu0
    %v1358 = vadd.f32 %v257, %v1357
    %1359 = vdwg.mxu0
    %1360 = vmatpush.bf16.msra.mxu0 %v913
    %1361 = vmatpush.bf16.msra.mxu0 %v909
    %1362 = vmatpush.bf16.msra.mxu0 %v905
    %1363 = vmatpush.bf16.msra.mxu0 %v901
    %1364 = vmatpush.bf16.msra.mxu0 %v897
    %1365 = vmatpush.bf16.msra.mxu0 %v893
    %1366 = vmatpush.bf16.msra.mxu0 %v889
    %1367 = vmatpush.bf16.msra.mxu0 %v885
    %1368 = vmatmul.bf16.gmra.mxu0 %v52
    %v1369 = vpop.f32.mrf.mxu0
    %v1370 = vadd.f32 %v1356, %v1369
    %v1371 = vpop.f32.mrf.mxu0
    %v1372 = vadd.f32 %v1358, %v1371
    %1373 = vdwg.mxu0
    %1374 = vmatpush.bf16.msra.mxu0 %v945
    %1375 = vmatpush.bf16.msra.mxu0 %v941
    %1376 = vmatpush.bf16.msra.mxu0 %v937
    %1377 = vmatpush.bf16.msra.mxu0 %v933
    %1378 = vmatpush.bf16.msra.mxu0 %v929
    %1379 = vmatpush.bf16.msra.mxu0 %v925
    %1380 = vmatpush.bf16.msra.mxu0 %v921
    %1381 = vmatpush.bf16.msra.mxu0 %v917
    %1382 = vmatmul.bf16.gmra.mxu0 %v53
    %v1383 = vpop.f32.mrf.mxu0
    %v1384 = vadd.f32 %v1370, %v1383
    %v1385 = vpop.f32.mrf.mxu0
    %v1386 = vadd.f32 %v1372, %v1385
    %1387 = vdwg.mxu0
    %1388 = vmatpush.bf16.msra.mxu0 %v977
    %1389 = vmatpush.bf16.msra.mxu0 %v973
    %1390 = vmatpush.bf16.msra.mxu0 %v969
    %1391 = vmatpush.bf16.msra.mxu0 %v965
    %1392 = vmatpush.bf16.msra.mxu0 %v961
    %1393 = vmatpush.bf16.msra.mxu0 %v957
    %1394 = vmatpush.bf16.msra.mxu0 %v953
    %1395 = vmatpush.bf16.msra.mxu0 %v949
    %1396 = vmatmul.bf16.gmra.mxu0 %v54
    %v1397 = vpop.f32.mrf.mxu0
    %v1398 = vadd.f32 %v1384, %v1397
    %v1399 = vpop.f32.mrf.mxu0
    %v1400 = vadd.f32 %v1386, %v1399
    %1401 = vdwg.mxu0
    %1402 = vmatpush.bf16.msra.mxu0 %v1009
    %1403 = vmatpush.bf16.msra.mxu0 %v1005
    %1404 = vmatpush.bf16.msra.mxu0 %v1001
    %1405 = vmatpush.bf16.msra.mxu0 %v997
    %1406 = vmatpush.bf16.msra.mxu0 %v993
    %1407 = vmatpush.bf16.msra.mxu0 %v989
    %1408 = vmatpush.bf16.msra.mxu0 %v985
    %1409 = vmatpush.bf16.msra.mxu0 %v981
    %1410 = vmatmul.bf16.gmra.mxu0 %v55
    %v1411 = vpop.f32.mrf.mxu0
    %v1412 = vadd.f32 %v1398, %v1411
    %v1413 = vpop.f32.mrf.mxu0
    %v1414 = vadd.f32 %v1400, %v1413
    %1415 = vdwg.mxu0
    %1416 = vmatpush.bf16.msra.mxu0 %v1041
    %1417 = vmatpush.bf16.msra.mxu0 %v1037
    %1418 = vmatpush.bf16.msra.mxu0 %v1033
    %1419 = vmatpush.bf16.msra.mxu0 %v1029
    %1420 = vmatpush.bf16.msra.mxu0 %v1025
    %1421 = vmatpush.bf16.msra.mxu0 %v1021
    %1422 = vmatpush.bf16.msra.mxu0 %v1017
    %1423 = vmatpush.bf16.msra.mxu0 %v1013
    %1424 = vmatmul.bf16.gmra.mxu0 %v56
    %v1425 = vpop.f32.mrf.mxu0
    %v1426 = vadd.f32 %v1412, %v1425
    %v1427 = vpop.f32.mrf.mxu0
    %v1428 = vadd.f32 %v1414, %v1427
    %1429 = vdwg.mxu0
    %1430 = vmatpush.bf16.msra.mxu0 0
    %1431 = vmatpush.bf16.msra.mxu0 0
    %1432 = vmatpush.bf16.msra.mxu0 0
    %1433 = vmatpush.bf16.msra.mxu0 0
    %1434 = vmatpush.bf16.msra.mxu0 0
    %1435 = vmatpush.bf16.msra.mxu0 0
    %1436 = vmatpush.bf16.msra.mxu0 0
    %1437 = vmatpush.bf16.msra.mxu0 %v1045
    %1438 = vmatmul.bf16.gmra.mxu0 %v1246
    %v1439 = vpop.f32.mrf.mxu0
    %v1440 = vadd.f32 %v1426, %v1439
    %v1441 = vpop.f32.mrf.mxu0
    %v1442 = vadd.f32 %v1428, %v1441
    %1443 = vdwg.mxu0
    %1444 = vmatpush.bf16.msra.mxu0 %v882
    %1445 = vmatpush.bf16.msra.mxu0 %v878
    %1446 = vmatpush.bf16.msra.mxu0 %v874
    %1447 = vmatpush.bf16.msra.mxu0 %v870
    %1448 = vmatpush.bf16.msra.mxu0 %v866
    %1449 = vmatpush.bf16.msra.mxu0 %v862
    %1450 = vmatpush.bf16.msra.mxu0 %v858
    %1451 = vmatpush.bf16.msra.mxu0 %v854
    %1452 = vmatmul.bf16.gmra.mxu0 %v51
    %v1453 = vpop.f32.mrf.mxu0
    %v1454 = vadd.f32 %v258, %v1453
    %v1455 = vpop.f32.mrf.mxu0
    %v1456 = vadd.f32 %v258, %v1455
    %1457 = vdwg.mxu0
    %1458 = vmatpush.bf16.msra.mxu0 %v914
    %1459 = vmatpush.bf16.msra.mxu0 %v910
    %1460 = vmatpush.bf16.msra.mxu0 %v906
    %1461 = vmatpush.bf16.msra.mxu0 %v902
    %1462 = vmatpush.bf16.msra.mxu0 %v898
    %1463 = vmatpush.bf16.msra.mxu0 %v894
    %1464 = vmatpush.bf16.msra.mxu0 %v890
    %1465 = vmatpush.bf16.msra.mxu0 %v886
    %1466 = vmatmul.bf16.gmra.mxu0 %v52
    %v1467 = vpop.f32.mrf.mxu0
    %v1468 = vadd.f32 %v1454, %v1467
    %v1469 = vpop.f32.mrf.mxu0
    %v1470 = vadd.f32 %v1456, %v1469
    %1471 = vdwg.mxu0
    %1472 = vmatpush.bf16.msra.mxu0 %v946
    %1473 = vmatpush.bf16.msra.mxu0 %v942
    %1474 = vmatpush.bf16.msra.mxu0 %v938
    %1475 = vmatpush.bf16.msra.mxu0 %v934
    %1476 = vmatpush.bf16.msra.mxu0 %v930
    %1477 = vmatpush.bf16.msra.mxu0 %v926
    %1478 = vmatpush.bf16.msra.mxu0 %v922
    %1479 = vmatpush.bf16.msra.mxu0 %v918
    %1480 = vmatmul.bf16.gmra.mxu0 %v53
    %v1481 = vpop.f32.mrf.mxu0
    %v1482 = vadd.f32 %v1468, %v1481
    %v1483 = vpop.f32.mrf.mxu0
    %v1484 = vadd.f32 %v1470, %v1483
    %1485 = vdwg.mxu0
    %1486 = vmatpush.bf16.msra.mxu0 %v978
    %1487 = vmatpush.bf16.msra.mxu0 %v974
    %1488 = vmatpush.bf16.msra.mxu0 %v970
    %1489 = vmatpush.bf16.msra.mxu0 %v966
    %1490 = vmatpush.bf16.msra.mxu0 %v962
    %1491 = vmatpush.bf16.msra.mxu0 %v958
    %1492 = vmatpush.bf16.msra.mxu0 %v954
    %1493 = vmatpush.bf16.msra.mxu0 %v950
    %1494 = vmatmul.bf16.gmra.mxu0 %v54
    %v1495 = vpop.f32.mrf.mxu0
    %v1496 = vadd.f32 %v1482, %v1495
    %v1497 = vpop.f32.mrf.mxu0
    %v1498 = vadd.f32 %v1484, %v1497
    %1499 = vdwg.mxu0
    %1500 = vmatpush.bf16.msra.mxu0 %v1010
    %1501 = vmatpush.bf16.msra.mxu0 %v1006
    %1502 = vmatpush.bf16.msra.mxu0 %v1002
    %1503 = vmatpush.bf16.msra.mxu0 %v998
    %1504 = vmatpush.bf16.msra.mxu0 %v994
    %1505 = vmatpush.bf16.msra.mxu0 %v990
    %1506 = vmatpush.bf16.msra.mxu0 %v986
    %1507 = vmatpush.bf16.msra.mxu0 %v982
    %1508 = vmatmul.bf16.gmra.mxu0 %v55
    %v1509 = vpop.f32.mrf.mxu0
    %v1510 = vadd.f32 %v1496, %v1509
    %v1511 = vpop.f32.mrf.mxu0
    %v1512 = vadd.f32 %v1498, %v1511
    %1513 = vdwg.mxu0
    %1514 = vmatpush.bf16.msra.mxu0 %v1042
    %1515 = vmatpush.bf16.msra.mxu0 %v1038
    %1516 = vmatpush.bf16.msra.mxu0 %v1034
    %1517 = vmatpush.bf16.msra.mxu0 %v1030
    %1518 = vmatpush.bf16.msra.mxu0 %v1026
    %1519 = vmatpush.bf16.msra.mxu0 %v1022
    %1520 = vmatpush.bf16.msra.mxu0 %v1018
    %1521 = vmatpush.bf16.msra.mxu0 %v1014
    %1522 = vmatmul.bf16.gmra.mxu0 %v56
    %v1523 = vpop.f32.mrf.mxu0
    %v1524 = vadd.f32 %v1510, %v1523
    %v1525 = vpop.f32.mrf.mxu0
    %v1526 = vadd.f32 %v1512, %v1525
    %1527 = vdwg.mxu0
    %1528 = vmatpush.bf16.msra.mxu0 0
    %1529 = vmatpush.bf16.msra.mxu0 0
    %1530 = vmatpush.bf16.msra.mxu0 0
    %1531 = vmatpush.bf16.msra.mxu0 0
    %1532 = vmatpush.bf16.msra.mxu0 0
    %1533 = vmatpush.bf16.msra.mxu0 0
    %1534 = vmatpush.bf16.msra.mxu0 0
    %1535 = vmatpush.bf16.msra.mxu0 %v1046
    %1536 = vmatmul.bf16.gmra.mxu0 %v1246
    %v1537 = vpop.f32.mrf.mxu0
    %v1538 = vadd.f32 %v1524, %v1537
    %v1539 = vpop.f32.mrf.mxu0
    %v1540 = vadd.f32 %v1526, %v1539
    %1541 = vdwg.mxu0
    %1542 = vmatpush.bf16.msra.mxu0 %v883
    %1543 = vmatpush.bf16.msra.mxu0 %v879
    %1544 = vmatpush.bf16.msra.mxu0 %v875
    %1545 = vmatpush.bf16.msra.mxu0 %v871
    %1546 = vmatpush.bf16.msra.mxu0 %v867
    %1547 = vmatpush.bf16.msra.mxu0 %v863
    %1548 = vmatpush.bf16.msra.mxu0 %v859
    %1549 = vmatpush.bf16.msra.mxu0 %v855
    %1550 = vmatmul.bf16.gmra.mxu0 %v51
    %v1551 = vpop.f32.mrf.mxu0
    %v1552 = vadd.f32 %v259, %v1551
    %v1553 = vpop.f32.mrf.mxu0
    %v1554 = vadd.f32 %v259, %v1553
    %1555 = vdwg.mxu0
    %1556 = vmatpush.bf16.msra.mxu0 %v915
    %1557 = vmatpush.bf16.msra.mxu0 %v911
    %1558 = vmatpush.bf16.msra.mxu0 %v907
    %1559 = vmatpush.bf16.msra.mxu0 %v903
    %1560 = vmatpush.bf16.msra.mxu0 %v899
    %1561 = vmatpush.bf16.msra.mxu0 %v895
    %1562 = vmatpush.bf16.msra.mxu0 %v891
    %1563 = vmatpush.bf16.msra.mxu0 %v887
    %1564 = vmatmul.bf16.gmra.mxu0 %v52
    %v1565 = vpop.f32.mrf.mxu0
    %v1566 = vadd.f32 %v1552, %v1565
    %v1567 = vpop.f32.mrf.mxu0
    %v1568 = vadd.f32 %v1554, %v1567
    %1569 = vdwg.mxu0
    %1570 = vmatpush.bf16.msra.mxu0 %v947
    %1571 = vmatpush.bf16.msra.mxu0 %v943
    %1572 = vmatpush.bf16.msra.mxu0 %v939
    %1573 = vmatpush.bf16.msra.mxu0 %v935
    %1574 = vmatpush.bf16.msra.mxu0 %v931
    %1575 = vmatpush.bf16.msra.mxu0 %v927
    %1576 = vmatpush.bf16.msra.mxu0 %v923
    %1577 = vmatpush.bf16.msra.mxu0 %v919
    %1578 = vmatmul.bf16.gmra.mxu0 %v53
    %v1579 = vpop.f32.mrf.mxu0
    %v1580 = vadd.f32 %v1566, %v1579
    %v1581 = vpop.f32.mrf.mxu0
    %v1582 = vadd.f32 %v1568, %v1581
    %1583 = vdwg.mxu0
    %1584 = vmatpush.bf16.msra.mxu0 %v979
    %1585 = vmatpush.bf16.msra.mxu0 %v975
    %1586 = vmatpush.bf16.msra.mxu0 %v971
    %1587 = vmatpush.bf16.msra.mxu0 %v967
    %1588 = vmatpush.bf16.msra.mxu0 %v963
    %1589 = vmatpush.bf16.msra.mxu0 %v959
    %1590 = vmatpush.bf16.msra.mxu0 %v955
    %1591 = vmatpush.bf16.msra.mxu0 %v951
    %1592 = vmatmul.bf16.gmra.mxu0 %v54
    %v1593 = vpop.f32.mrf.mxu0
    %v1594 = vadd.f32 %v1580, %v1593
    %v1595 = vpop.f32.mrf.mxu0
    %v1596 = vadd.f32 %v1582, %v1595
    %1597 = vdwg.mxu0
    %1598 = vmatpush.bf16.msra.mxu0 %v1011
    %1599 = vmatpush.bf16.msra.mxu0 %v1007
    %1600 = vmatpush.bf16.msra.mxu0 %v1003
    %1601 = vmatpush.bf16.msra.mxu0 %v999
    %1602 = vmatpush.bf16.msra.mxu0 %v995
    %1603 = vmatpush.bf16.msra.mxu0 %v991
    %1604 = vmatpush.bf16.msra.mxu0 %v987
    %1605 = vmatpush.bf16.msra.mxu0 %v983
    %1606 = vmatmul.bf16.gmra.mxu0 %v55
    %v1607 = vpop.f32.mrf.mxu0
    %v1608 = vadd.f32 %v1594, %v1607
    %v1609 = vpop.f32.mrf.mxu0
    %v1610 = vadd.f32 %v1596, %v1609
    %1611 = vdwg.mxu0
    %1612 = vmatpush.bf16.msra.mxu0 %v1043
    %1613 = vmatpush.bf16.msra.mxu0 %v1039
    %1614 = vmatpush.bf16.msra.mxu0 %v1035
    %1615 = vmatpush.bf16.msra.mxu0 %v1031
    %1616 = vmatpush.bf16.msra.mxu0 %v1027
    %1617 = vmatpush.bf16.msra.mxu0 %v1023
    %1618 = vmatpush.bf16.msra.mxu0 %v1019
    %1619 = vmatpush.bf16.msra.mxu0 %v1015
    %1620 = vmatmul.bf16.gmra.mxu0 %v56
    %v1621 = vpop.f32.mrf.mxu0
    %v1622 = vadd.f32 %v1608, %v1621
    %v1623 = vpop.f32.mrf.mxu0
    %v1624 = vadd.f32 %v1610, %v1623
    %1625 = vdwg.mxu0
    %1626 = vmatpush.bf16.msra.mxu0 0
    %1627 = vmatpush.bf16.msra.mxu0 0
    %1628 = vmatpush.bf16.msra.mxu0 0
    %1629 = vmatpush.bf16.msra.mxu0 0
    %1630 = vmatpush.bf16.msra.mxu0 0
    %1631 = vmatpush.bf16.msra.mxu0 0
    %1632 = vmatpush.bf16.msra.mxu0 0
    %1633 = vmatpush.bf16.msra.mxu0 %v1047
    %1634 = vmatmul.bf16.gmra.mxu0 %v1246
    %v1635 = vpop.f32.mrf.mxu0
    %v1636 = vadd.f32 %v1622, %v1635
    %v1637 = vpop.f32.mrf.mxu0
    %v1638 = vadd.f32 %v1624, %v1637
    %1639 = vdwg.mxu0
    %v1640 = vmax.f32 %v1342, 0.0
    %v1641 = vmax.f32 %v1440, 0.0
    %v1642 = vmax.f32 %v1538, 0.0
    %v1643 = vmax.f32 %v1636, 0.0
    %v1644 = vmax.f32 %v1344, 0.0
    %v1645 = vmax.f32 %v1442, 0.0
    %v1646 = vmax.f32 %v1540, 0.0
    %v1647 = vmax.f32 %v1638, 0.0
    %v1648 = vpack.c.bf16 %v1644, %v1640
    %v1649 = vpack.c.bf16 %v1645, %v1641
    %v1650 = vpack.c.bf16 %v1646, %v1642
    %v1651 = vpack.c.bf16 %v1647, %v1643
    %v1652 = vld [vmem:[%s3] sm:$0xf]
    %v1653 = vld [vmem:[%s3 + $0x4] sm:$0xf]
    %v1654 = vld [vmem:[%s3 + $0x8] sm:$0xf]
    %v1655 = vld [vmem:[%s3 + $0xc] sm:$0xf]
    %v1656 = vld [vmem:[%s3 + $0x10] sm:$0xf]
    %v1657 = vld [vmem:[%s3 + $0x14] sm:$0xf]
    %v1658 = vld [vmem:[%s3 + $0x18] sm:$0xf]
    %v1659 = vld [vmem:[%s3 + $0x1c] sm:$0xf]
    %v1660 = vld [vmem:[%s3 + $0x20] sm:$0xf]
    %v1661 = vld [vmem:[%s3 + $0x24] sm:$0xf]
    %v1662 = vld [vmem:[%s3 + $0x28] sm:$0xf]
    %v1663 = vld [vmem:[%s3 + $0x2c] sm:$0xf]
    %v1664 = vld [vmem:[%s3 + $0x30] sm:$0xf]
    %v1665 = vld [vmem:[%s3 + $0x34] sm:$0xf]
    %v1666 = vld [vmem:[%s3 + $0x38] sm:$0xf]
    %v1667 = vld [vmem:[%s3 + $0x3c] sm:$0xf]
    %v1668 = vld [vmem:[%s3 + $0x40] sm:$0xf]
    %v1669 = vld [vmem:[%s3 + $0x44] sm:$0xf]
    %v1670 = vld [vmem:[%s3 + $0x48] sm:$0xf]
    %v1671 = vld [vmem:[%s3 + $0x4c] sm:$0xf]
    %v1672 = vld [vmem:[%s3 + $0x50] sm:$0xf]
    %v1673 = vld [vmem:[%s3 + $0x54] sm:$0xf]
    %v1674 = vld [vmem:[%s3 + $0x58] sm:$0xf]
    %v1675 = vld [vmem:[%s3 + $0x5c] sm:$0xf]
    %v1676 = vld [vmem:[%s3 + $0x60] sm:$0xf]
    %v1677 = vld [vmem:[%s3 + $0x64] sm:$0xf]
    %v1678 = vld [vmem:[%s3 + $0x68] sm:$0xf]
    %v1679 = vld [vmem:[%s3 + $0x6c] sm:$0xf]
    %v1680 = vld [vmem:[%s3 + $0x70] sm:$0xf]
    %v1681 = vld [vmem:[%s3 + $0x74] sm:$0xf]
    %v1682 = vld [vmem:[%s3 + $0x78] sm:$0xf]
    %v1683 = vld [vmem:[%s3 + $0x7c] sm:$0xf]
    %v1684 = vld [vmem:[%s3 + $0x80] sm:$0xf]
    %v1685 = vld [vmem:[%s3 + $0x84] sm:$0xf]
    %v1686 = vld [vmem:[%s3 + $0x88] sm:$0xf]
    %v1687 = vld [vmem:[%s3 + $0x8c] sm:$0xf]
    %v1688 = vld [vmem:[%s3 + $0x90] sm:$0xf]
    %v1689 = vld [vmem:[%s3 + $0x94] sm:$0xf]
    %v1690 = vld [vmem:[%s3 + $0x98] sm:$0xf]
    %v1691 = vld [vmem:[%s3 + $0x9c] sm:$0xf]
    %v1692 = vld [vmem:[%s3 + $0xa0] sm:$0xf]
    %v1693 = vld [vmem:[%s3 + $0xa4] sm:$0xf]
    %v1694 = vld [vmem:[%s3 + $0xa8] sm:$0xf]
    %v1695 = vld [vmem:[%s3 + $0xac] sm:$0xf]
    %v1696 = vld [vmem:[%s3 + $0xb0] sm:$0xf]
    %v1697 = vld [vmem:[%s3 + $0xb4] sm:$0xf]
    %v1698 = vld [vmem:[%s3 + $0xb8] sm:$0xf]
    %v1699 = vld [vmem:[%s3 + $0xbc] sm:$0xf]
    %v1700 = vld [vmem:[%s3 + $0xc0] sm:$0xf]
    %v1701 = vld [vmem:[%s3 + $0xc4] sm:$0xf]
    %v1702 = vld [vmem:[%s3 + $0xc8] sm:$0xf]
    %v1703 = vld [vmem:[%s3 + $0xcc] sm:$0xf]
    %v1704 = vld [vmem:[%s3 + $0xd0] sm:$0xf]
    %v1705 = vld [vmem:[%s3 + $0xd4] sm:$0xf]
    %v1706 = vld [vmem:[%s3 + $0xd8] sm:$0xf]
    %v1707 = vld [vmem:[%s3 + $0xdc] sm:$0xf]
    %v1708 = vld [vmem:[%s3 + $0xe0] sm:$0xf]
    %v1709 = vld [vmem:[%s3 + $0xe4] sm:$0xf]
    %v1710 = vld [vmem:[%s3 + $0xe8] sm:$0xf]
    %v1711 = vld [vmem:[%s3 + $0xec] sm:$0xf]
    %v1712 = vld [vmem:[%s3 + $0xf0] sm:$0xf]
    %v1713 = vld [vmem:[%s3 + $0xf4] sm:$0xf]
    %v1714 = vld [vmem:[%s3 + $0xf8] sm:$0xf]
    %v1715 = vld [vmem:[%s3 + $0xfc] sm:$0xf]
    %v1716 = vld [vmem:[%s4] sm:$0x1]
    %v1718 = vperm.slane %v1716, 0
    %v1784 = vunpack.c.l.b16 %v1652
    %v1785 = vunpack.c.l.b16 %v1653
    %v1786 = vunpack.c.l.b16 %v1654
    %v1787 = vunpack.c.l.b16 %v1655
    %v1788 = vunpack.c.l.b16 %v1656
    %v1789 = vunpack.c.l.b16 %v1657
    %v1790 = vunpack.c.l.b16 %v1658
    %v1791 = vunpack.c.l.b16 %v1659
    %v1792 = vunpack.c.l.b16 %v1660
    %v1793 = vunpack.c.l.b16 %v1661
    %v1794 = vunpack.c.l.b16 %v1662
    %v1795 = vunpack.c.l.b16 %v1663
    %v1796 = vunpack.c.l.b16 %v1664
    %v1797 = vunpack.c.l.b16 %v1665
    %v1798 = vunpack.c.l.b16 %v1666
    %v1799 = vunpack.c.l.b16 %v1667
    %v1800 = vunpack.c.l.b16 %v1668
    %v1801 = vunpack.c.l.b16 %v1669
    %v1802 = vunpack.c.l.b16 %v1670
    %v1803 = vunpack.c.l.b16 %v1671
    %v1804 = vunpack.c.l.b16 %v1672
    %v1805 = vunpack.c.l.b16 %v1673
    %v1806 = vunpack.c.l.b16 %v1674
    %v1807 = vunpack.c.l.b16 %v1675
    %v1808 = vunpack.c.l.b16 %v1676
    %v1809 = vunpack.c.l.b16 %v1677
    %v1810 = vunpack.c.l.b16 %v1678
    %v1811 = vunpack.c.l.b16 %v1679
    %v1812 = vunpack.c.l.b16 %v1680
    %v1813 = vunpack.c.l.b16 %v1681
    %v1814 = vunpack.c.l.b16 %v1682
    %v1815 = vunpack.c.l.b16 %v1683
    %v1816 = vunpack.c.l.b16 %v1684
    %v1817 = vunpack.c.l.b16 %v1685
    %v1818 = vunpack.c.l.b16 %v1686
    %v1819 = vunpack.c.l.b16 %v1687
    %v1820 = vunpack.c.l.b16 %v1688
    %v1821 = vunpack.c.l.b16 %v1689
    %v1822 = vunpack.c.l.b16 %v1690
    %v1823 = vunpack.c.l.b16 %v1691
    %v1824 = vunpack.c.l.b16 %v1692
    %v1825 = vunpack.c.l.b16 %v1693
    %v1826 = vunpack.c.l.b16 %v1694
    %v1827 = vunpack.c.l.b16 %v1695
    %v1828 = vunpack.c.l.b16 %v1696
    %v1829 = vunpack.c.l.b16 %v1697
    %v1830 = vunpack.c.l.b16 %v1698
    %v1831 = vunpack.c.l.b16 %v1699
    %v1832 = vunpack.c.l.b16 %v1700
    %v1833 = vunpack.c.l.b16 %v1701
    %v1834 = vunpack.c.l.b16 %v1702
    %v1835 = vunpack.c.l.b16 %v1703
    %v1836 = vunpack.c.l.b16 %v1704
    %v1837 = vunpack.c.l.b16 %v1705
    %v1838 = vunpack.c.l.b16 %v1706
    %v1839 = vunpack.c.l.b16 %v1707
    %v1840 = vunpack.c.l.b16 %v1708
    %v1841 = vunpack.c.l.b16 %v1709
    %v1842 = vunpack.c.l.b16 %v1710
    %v1843 = vunpack.c.l.b16 %v1711
    %v1844 = vunpack.c.l.b16 %v1712
    %v1845 = vunpack.c.l.b16 %v1713
    %v1846 = vunpack.c.l.b16 %v1714
    %v1847 = vunpack.c.l.b16 %v1715
    %v1848 = vpack.c.b16 %v1785, %v1784
    %v1849 = vpack.c.b16 %v1787, %v1786
    %v1850 = vpack.c.b16 %v1789, %v1788
    %v1851 = vpack.c.b16 %v1791, %v1790
    %v1852 = vpack.c.b16 %v1793, %v1792
    %v1853 = vpack.c.b16 %v1795, %v1794
    %v1854 = vpack.c.b16 %v1797, %v1796
    %v1855 = vpack.c.b16 %v1799, %v1798
    %v1856 = vpack.c.b16 %v1801, %v1800
    %v1857 = vpack.c.b16 %v1803, %v1802
    %v1858 = vpack.c.b16 %v1805, %v1804
    %v1859 = vpack.c.b16 %v1807, %v1806
    %v1860 = vpack.c.b16 %v1809, %v1808
    %v1861 = vpack.c.b16 %v1811, %v1810
    %v1862 = vpack.c.b16 %v1813, %v1812
    %v1863 = vpack.c.b16 %v1815, %v1814
    %v1864 = vpack.c.b16 %v1817, %v1816
    %v1865 = vpack.c.b16 %v1819, %v1818
    %v1866 = vpack.c.b16 %v1821, %v1820
    %v1867 = vpack.c.b16 %v1823, %v1822
    %v1868 = vpack.c.b16 %v1825, %v1824
    %v1869 = vpack.c.b16 %v1827, %v1826
    %v1870 = vpack.c.b16 %v1829, %v1828
    %v1871 = vpack.c.b16 %v1831, %v1830
    %v1872 = vpack.c.b16 %v1833, %v1832
    %v1873 = vpack.c.b16 %v1835, %v1834
    %v1874 = vpack.c.b16 %v1837, %v1836
    %v1875 = vpack.c.b16 %v1839, %v1838
    %v1876 = vpack.c.b16 %v1841, %v1840
    %v1877 = vpack.c.b16 %v1843, %v1842
    %v1878 = vpack.c.b16 %v1845, %v1844
    %v1879 = vpack.c.b16 %v1847, %v1846
    %1912 = vmatpush.bf16.msra.mxu0 %v1855
    %1913 = vmatpush.bf16.msra.mxu0 %v1854
    %1914 = vmatpush.bf16.msra.mxu0 %v1853
    %1915 = vmatpush.bf16.msra.mxu0 %v1852
    %1916 = vmatpush.bf16.msra.mxu0 %v1851
    %1917 = vmatpush.bf16.msra.mxu0 %v1850
    %1918 = vmatpush.bf16.msra.mxu0 %v1849
    %1919 = vmatpush.bf16.msra.mxu0 %v1848
    %1920 = vmatmul.bf16.gmra.mxu0 %v1648
    %v1921 = vpop.f32.mrf.mxu0
    %v1922 = vadd.f32 %v1718, %v1921
    %v1923 = vpop.f32.mrf.mxu0
    %v1924 = vadd.f32 %v1718, %v1923
    %1925 = vdwg.mxu0
    %1926 = vmatpush.bf16.msra.mxu0 %v1863
    %1927 = vmatpush.bf16.msra.mxu0 %v1862
    %1928 = vmatpush.bf16.msra.mxu0 %v1861
    %1929 = vmatpush.bf16.msra.mxu0 %v1860
    %1930 = vmatpush.bf16.msra.mxu0 %v1859
    %1931 = vmatpush.bf16.msra.mxu0 %v1858
    %1932 = vmatpush.bf16.msra.mxu0 %v1857
    %1933 = vmatpush.bf16.msra.mxu0 %v1856
    %1934 = vmatmul.bf16.gmra.mxu0 %v1649
    %v1935 = vpop.f32.mrf.mxu0
    %v1936 = vadd.f32 %v1922, %v1935
    %v1937 = vpop.f32.mrf.mxu0
    %v1938 = vadd.f32 %v1924, %v1937
    %1939 = vdwg.mxu0
    %1940 = vmatpush.bf16.msra.mxu0 %v1871
    %1941 = vmatpush.bf16.msra.mxu0 %v1870
    %1942 = vmatpush.bf16.msra.mxu0 %v1869
    %1943 = vmatpush.bf16.msra.mxu0 %v1868
    %1944 = vmatpush.bf16.msra.mxu0 %v1867
    %1945 = vmatpush.bf16.msra.mxu0 %v1866
    %1946 = vmatpush.bf16.msra.mxu0 %v1865
    %1947 = vmatpush.bf16.msra.mxu0 %v1864
    %1948 = vmatmul.bf16.gmra.mxu0 %v1650
    %v1949 = vpop.f32.mrf.mxu0
    %v1950 = vadd.f32 %v1936, %v1949
    %v1951 = vpop.f32.mrf.mxu0
    %v1952 = vadd.f32 %v1938, %v1951
    %1953 = vdwg.mxu0
    %1954 = vmatpush.bf16.msra.mxu0 %v1879
    %1955 = vmatpush.bf16.msra.mxu0 %v1878
    %1956 = vmatpush.bf16.msra.mxu0 %v1877
    %1957 = vmatpush.bf16.msra.mxu0 %v1876
    %1958 = vmatpush.bf16.msra.mxu0 %v1875
    %1959 = vmatpush.bf16.msra.mxu0 %v1874
    %1960 = vmatpush.bf16.msra.mxu0 %v1873
    %1961 = vmatpush.bf16.msra.mxu0 %v1872
    %1962 = vmatmul.bf16.gmra.mxu0 %v1651
    %v1963 = vpop.f32.mrf.mxu0
    %v1964 = vadd.f32 %v1950, %v1963
    %v1965 = vpop.f32.mrf.mxu0
    %v1966 = vadd.f32 %v1952, %v1965
    %1967 = vdwg.mxu0
    %v1968 = vpack.c.bf16 %v1964, %v1964
    %v1969 = vpack.c.bf16 %v1966, %v1966
    %1970 = vst [vmem:[%s5] sm:$0xf] %v1968
    %1971 = vst [vmem:[%s5 + $0x4] sm:$0xf] %v1969
    // Predicated region
    $region26: #{dnn_random_fit_forward.1} parent=1 // pred_check
      _
    $region27: #{dnn_random_fit_forward.1} parent=1 // pred_check_branch
      %1973 = sbr.rel (0) target = $region29
    $region28: #{dnn_random_fit_forward.1} parent=1 // pred_region
      _
    $region29: #{dnn_random_fit_forward.1} parent=1 // pred_fallthru
      _
    // Predicated region
    $region30: #{dnn_random_fit_forward.1} parent=1 // pred_check
      _
    $region31: #{dnn_random_fit_forward.1} parent=1 // pred_check_branch
      %1975 = sbr.rel (0) target = $region33
    $region32: #{dnn_random_fit_forward.1} parent=1 // pred_region
      _
    $region33: #{dnn_random_fit_forward.1} parent=1 // pred_fallthru
      _
    %1976 = vsyncpa [#allocation3], 1

</llo_original>
